<compile_context>
chip_gen: v5e
topology: v5e:2x2
jax: 0.10.0
libtpu: 0.0.40
codegen_flags: <defaults>
</compile_context>

<pallas_src>
import functools
import math

import jax
import jax.numpy as jnp
from jax.experimental import pallas as pl
from jax.experimental.pallas import tpu as pltpu

_INV_SQRT2 = 0.7071067811865476
_SQRT_2_OVER_PI = 0.7978845608028654


# ---------------------------------------------------------------------------
# Kernels
# ---------------------------------------------------------------------------

def _apply_activation(h, activation, approx_gelu):
    # h is f32; elementwise math stays f32 (v5e has no bf16 VPU/EUP).
    if activation == "relu":
        return jnp.maximum(h, 0.0)
    if activation in ("silu", "swish"):
        return h * jax.nn.sigmoid(h)
    if approx_gelu:
        # tanh-approx GELU: transcendental lands on the EUP slot (nearly free
        # on v6e/v7x).  Slightly different numerics than torch's exact GELU.
        return 0.5 * h * (1.0 + jnp.tanh(_SQRT_2_OVER_PI * (h + 0.044715 * h * h * h)))
    # exact erf-based GELU, matching torch.nn.GELU() default.
    return 0.5 * h * (1.0 + jax.lax.erf(h * _INV_SQRT2))


def ffn_kernel_resident(x_ref, w1_ref, b1_ref, w2_ref, b2_ref, o_ref, *,
                        activation, approx_gelu):
    """Weights fully VMEM-resident: one M tile per grid step, no accumulator."""
    h = jnp.dot(x_ref[...], w1_ref[...], preferred_element_type=jnp.float32)
    h = h + b1_ref[...].astype(jnp.float32)          # (tm, d_ff) + (1, d_ff)
    h = _apply_activation(h, activation, approx_gelu)
    h = h.astype(w2_ref.dtype)                        # downcast for 2nd MXU pass
    y = jnp.dot(h, w2_ref[...], preferred_element_type=jnp.float32)
    y = y + b2_ref[...].astype(jnp.float32)
    # TODO(synk): dropout is identity in eval mode; training-mode dropout
    # (pltpu.prng_seed + prng_random_bits masking) intentionally omitted.
    o_ref[...] = y.astype(o_ref.dtype)


def ffn_kernel_tiled(x_ref, w1_ref, b1_ref, w2_ref, b2_ref, o_ref, acc_ref, *,
                     activation, approx_gelu):
    """d_ff-tiled reduction: acc += act(x @ W1[:, f] + b1[f]) @ W2[f, :]."""
    f = pl.program_id(1)

    @pl.when(f == 0)
    def _init():
        acc_ref[...] = jnp.zeros_like(acc_ref)

    h = jnp.dot(x_ref[...], w1_ref[...], preferred_element_type=jnp.float32)
    h = h + b1_ref[...].astype(jnp.float32)
    h = _apply_activation(h, activation, approx_gelu)
    h = h.astype(w2_ref.dtype)
    acc_ref[...] += jnp.dot(h, w2_ref[...], preferred_element_type=jnp.float32)

    @pl.when(f == pl.num_programs(1) - 1)
    def _finalize():
        y = acc_ref[...] + b2_ref[...].astype(jnp.float32)
        o_ref[...] = y.astype(o_ref.dtype)


# ---------------------------------------------------------------------------
# Capability / budget helpers
# ---------------------------------------------------------------------------

@functools.lru_cache(maxsize=1)
def _vmem_budget_bytes():
    """Physical VMEM per TensorCore minus ~8 MiB headroom for Mosaic scratch."""
    try:
        cap = int(pltpu.get_tpu_info().vmem_capacity_bytes)
    except Exception:
        cap = 128 * 2**20
    return max(16 * 2**20, cap - 8 * 2**20)


@functools.lru_cache(maxsize=1)
def _single_buffer_supported():
    """Explicit capability probe for pipeline_mode=pl.Buffered(1)."""
    def _probe(x_ref, w_ref, o_ref):
        o_ref[...] = x_ref[...] + w_ref[...]

    try:
        fn = pl.pallas_call(
            _probe,
            out_shape=jax.ShapeDtypeStruct((8, 128), jnp.float32),
            grid=(1,),
            in_specs=[
                pl.BlockSpec((8, 128), lambda i: (0, 0)),
                pl.BlockSpec((8, 128), lambda i: (0, 0),
                             pipeline_mode=pl.Buffered(1)),
            ],
            out_specs=pl.BlockSpec((8, 128), lambda i: (0, 0)),
        )
        z = jnp.zeros((8, 128), jnp.float32)
        jax.jit(fn).lower(z, z).compile()
        return True
    except Exception:
        return False


def _vmem_need_resident(tm, d_model, d_ff, csz, osz, single_buf):
    wbuf = 1 if single_buf else 2
    return int(
        2 * tm * d_model * csz                 # x tiles (double-buffered)
        + 2 * tm * d_model * osz               # out tiles (double-buffered)
        + wbuf * 2 * d_model * d_ff * csz      # W1 + W2 (resident)
        + wbuf * (d_ff + d_model) * 4          # biases (f32)
        + int(1.5 * tm * d_ff * 4)             # fc1 intermediate (f32 + bf16 + staging)
    )


def _vmem_need_tiled(tm, tf, d_model, csz, osz):
    return int(
        2 * tm * d_model * csz                 # x tiles
        + 2 * tm * d_model * osz               # out tiles
        + 2 * 2 * d_model * tf * csz           # W1/W2 tiles (double-buffered)
        + 2 * tf * 4 + d_model * 4             # biases (f32)
        + tm * d_model * 4                     # f32 accumulator scratch
        + int(1.5 * tm * tf * 4)               # fc1 intermediate
    )


def _choose_tm(M, target):
    """M-tile size: sublane-aligned, <= target, prefers an exact divisor of M
    (avoids the jnp.pad copy of x) and keeps >= 2 M tiles when M allows so
    both v7x TensorCores get work."""
    target = max(16, (int(target) // 16) * 16)
    if M >= 2 * 128:
        target = min(target, max(128, ((M // 2) // 16) * 16))
    if M <= target:
        tm = ((M + 15) // 16) * 16
        return tm, tm
    # Largest multiple-of-16 divisor of M that is not much smaller than target.
    for cand in range(target, 15, -16):
        if M % cand == 0:
            if cand * 4 >= target:
                return cand, M
            break
    # No good divisor: pad minimally with an evenly split tile size.
    ntiles = pl.cdiv(M, target)
    tm = ((pl.cdiv(M, ntiles) + 15) // 16) * 16
    Mp = pl.cdiv(M, tm) * tm
    return tm, Mp


def _weight_spec(block_shape, index_map, single_buffer):
    if single_buffer:
        # Block index is constant across the grid: double-buffering would only
        # double its VMEM footprint, so request a single buffer.
        return pl.BlockSpec(block_shape, index_map, pipeline_mode=pl.Buffered(1))
    return pl.BlockSpec(block_shape, index_map)


# ---------------------------------------------------------------------------
# pallas_call wrapper
# ---------------------------------------------------------------------------

def _ffn_pallas(x2d, w1, b1_2d, w2, b2_2d, *, tm, tf, activation, approx_gelu,
                out_dtype, single_buffer_weights, vmem_limit):
    Mp, d_model = x2d.shape
    d_ff = w1.shape[1]
    nm, nf = Mp // tm, d_ff // tf
    csz = jnp.dtype(x2d.dtype).itemsize
    osz = jnp.dtype(out_dtype).itemsize

    flops = 4 * Mp * d_model * d_ff
    transcendentals = 0 if activation == "relu" else Mp * d_ff

    if nf == 1:
        # Resident weights: loaded once, direct output write, no accumulator.
        bytes_accessed = (Mp * d_model * (csz + osz)
                          + 2 * d_model * d_ff * csz
                          + (d_ff + d_model) * 4)
        grid_spec = pltpu.PrefetchScalarGridSpec(
            num_scalar_prefetch=0,
            grid=(nm,),
            in_specs=[
                pl.BlockSpec((tm, d_model), lambda i: (i, 0)),                    # x
                _weight_spec((d_model, d_ff), lambda i: (0, 0), single_buffer_weights),  # W1
                _weight_spec((1, d_ff), lambda i: (0, 0), single_buffer_weights),        # b1
                _weight_spec((d_ff, d_model), lambda i: (0, 0), single_buffer_weights),  # W2
                _weight_spec((1, d_model), lambda i: (0, 0), single_buffer_weights),     # b2
            ],
            out_specs=pl.BlockSpec((tm, d_model), lambda i: (i, 0)),
        )
        kernel = functools.partial(ffn_kernel_resident, activation=activation,
                                   approx_gelu=approx_gelu)
        dims = ("parallel",)
    else:
        # Streamed weights: W1/W2 re-read per M tile (worst case).
        bytes_accessed = (Mp * d_model * (csz + osz)
                          + nm * 2 * d_model * d_ff * csz
                          + (d_ff + d_model) * 4)
        grid_spec = pltpu.PrefetchScalarGridSpec(
            num_scalar_prefetch=0,
            grid=(nm, nf),
            in_specs=[
                pl.BlockSpec((tm, d_model), lambda i, f: (i, 0)),                 # x
                pl.BlockSpec((d_model, tf), lambda i, f: (0, f)),                 # W1 tile
                pl.BlockSpec((1, tf), lambda i, f: (0, f)),                       # b1 tile
                pl.BlockSpec((tf, d_model), lambda i, f: (f, 0)),                 # W2 tile
                _weight_spec((1, d_model), lambda i, f: (0, 0),
                             single_buffer_weights),                             # b2
            ],
            out_specs=pl.BlockSpec((tm, d_model), lambda i, f: (i, 0)),
            scratch_shapes=[pltpu.VMEM((tm, d_model), jnp.float32)],
        )
        kernel = functools.partial(ffn_kernel_tiled, activation=activation,
                                   approx_gelu=approx_gelu)
        # M axis parallel (megacore sharding); d_ff reduction axis last + arbitrary.
        dims = ("parallel", "arbitrary")

    return pl.pallas_call(
        kernel,
        out_shape=jax.ShapeDtypeStruct((Mp, d_model), out_dtype),
        grid_spec=grid_spec,
        compiler_params=pltpu.CompilerParams(
            dimension_semantics=dims,
            vmem_limit_bytes=vmem_limit,
        ),
        cost_estimate=pl.CostEstimate(
            flops=flops,
            transcendentals=transcendentals,
            bytes_accessed=bytes_accessed,
        ),
    )(x2d, w1, b1_2d, w2, b2_2d)


# ---------------------------------------------------------------------------
# Public API
# ---------------------------------------------------------------------------

def prepare_params(w1, b1, w2, b2, compute_dtype=jnp.bfloat16):
    """Cast weights to the MXU operand dtype ONCE, outside the forward path.

    Avoids a per-call f32->bf16 weight cast (a separate un-hidden XLA op that
    roughly doubles weight HBM traffic).  Biases stay f32.
    """
    return (w1.astype(compute_dtype), b1.astype(jnp.float32),
            w2.astype(compute_dtype), b2.astype(jnp.float32))


def feed_forward(x, w1, b1, w2, b2, *, tm=None, tf=None, activation="gelu",
                 compute_dtype=jnp.bfloat16, approx_gelu=False):
    """x: [B, S, d_model] -> [B, S, d_model].

    tm: target rows (batch*seq) per M tile.  None = auto (256 resident,
        512 streamed-weight regime; clamped so >= 2 M tiles when possible).
    tf: d_ff tile size.  None = auto: weights stay fully VMEM-resident if they
        fit the chip's VMEM budget (v5e/v6e sweet spot), otherwise the largest
        tf that fits is used (v7x / very large d_ff).
    compute_dtype: MXU operand dtype (bf16); accumulation is f32, bias-add +
        activation are f32, output keeps x.dtype.
    approx_gelu: use tanh-approx GELU (EUP transcendental; v6e/v7x VPU relief).
        Default False = exact erf GELU matching torch.nn.GELU().
    """
    B, S, d_model = x.shape
    d_ff = w1.shape[1]
    assert w1.shape == (d_model, d_ff) and w2.shape == (d_ff, d_model)
    assert b1.shape == (d_ff,) and b2.shape == (d_model,)
    assert d_model % 128 == 0 and d_ff % 128 == 0, (
        "d_model / d_ff must be multiples of 128 (TPU lane width)")
    if activation not in ("gelu", "relu", "silu", "swish"):
        activation = "gelu"     # module warns and defaults to GELU

    out_dtype = x.dtype
    M = B * S
    csz = jnp.dtype(compute_dtype).itemsize
    osz = jnp.dtype(out_dtype).itemsize
    budget = _vmem_budget_bytes()
    single_buf = _single_buffer_supported()

    # --- generation-aware tile selection (driven by the VMEM budget) ---
    if tf is None:
        tm_sel, Mp = _choose_tm(M, tm if tm is not None else 256)
        vmem_need = _vmem_need_resident(tm_sel, d_model, d_ff, csz, osz, single_buf)
        if vmem_need <= budget:
            tf_sel = d_ff                       # resident weights
        else:
            # Streamed-weight regime: larger tm keeps it MXU-bound.
            tm_sel, Mp = _choose_tm(M, tm if tm is not None else 512)
            tf_sel = 128
            for cand in range(d_ff, 127, -128):
                if d_ff % cand == 0 and \
                        _vmem_need_tiled(tm_sel, cand, d_model, csz, osz) <= budget:
                    tf_sel = cand
                    break
            vmem_need = _vmem_need_tiled(tm_sel, tf_sel, d_model, csz, osz)
    else:
        assert d_ff % tf == 0 and tf % 128 == 0
        tf_sel = tf
        default_tm = 256 if tf == d_ff else 512
        tm_sel, Mp = _choose_tm(M, tm if tm is not None else default_tm)
        if tf == d_ff:
            vmem_need = _vmem_need_resident(tm_sel, d_model, d_ff, csz, osz, single_buf)
        else:
            vmem_need = _vmem_need_tiled(tm_sel, tf_sel, d_model, csz, osz)

    # Never request more scoped VMEM than the chip physically has.
    vmem_limit = int(min(budget, max(vmem_need + (8 << 20), 32 << 20)))

    # --- operand preparation (no-op casts if prepare_params was used) ---
    w1c = w1 if w1.dtype == compute_dtype else w1.astype(compute_dtype)
    w2c = w2 if w2.dtype == compute_dtype else w2.astype(compute_dtype)
    b1_2d = b1.reshape(1, d_ff).astype(jnp.float32)
    b2_2d = b2.reshape(1, d_model).astype(jnp.float32)

    x2d = x.reshape(M, d_model)
    if x2d.dtype != compute_dtype:
        x2d = x2d.astype(compute_dtype)
    if Mp != M:
        # TODO(synk): a masked last-tile inside the kernel would avoid this
        # extra HBM read+write of x; only hit when no good divisor tm exists.
        x2d = jnp.pad(x2d, ((0, Mp - M), (0, 0)))

    # TODO(synk): v7x inference option (fp8 weights + per-channel scales in the
    # f32 epilogue) not implemented.
    outp = _ffn_pallas(x2d, w1c, b1_2d, w2c, b2_2d,
                       tm=tm_sel, tf=tf_sel, activation=activation,
                       approx_gelu=approx_gelu, out_dtype=out_dtype,
                       single_buffer_weights=single_buf,
                       vmem_limit=vmem_limit)

    return outp[:M].reshape(B, S, d_model)


def init_params(key, d_model, d_ff, dtype=jnp.float32):
    """Deterministic init mimicking nn.Linear defaults U(-1/sqrt(fan_in), +).

    Weights are stored as (in_features, out_features), i.e. the transpose of
    torch's Linear.weight, so the kernel computes x @ W directly.
    """
    k1, k2, k3, k4 = jax.random.split(key, 4)
    bound1 = 1.0 / math.sqrt(d_model)
    bound2 = 1.0 / math.sqrt(d_ff)
    w1 = jax.random.uniform(k1, (d_model, d_ff), dtype, -bound1, bound1)
    b1 = jax.random.uniform(k2, (d_ff,), dtype, -bound1, bound1)
    w2 = jax.random.uniform(k3, (d_ff, d_model), dtype, -bound2, bound2)
    b2 = jax.random.uniform(k4, (d_model,), dtype, -bound2, bound2)
    return w1, b1, w2, b2


if __name__ == "__main__":
    # Small but lane-dense shapes: x is [batch, seq, d_model], d_ff = 4*d_model.
    # batch*seq = 400 exercises the divisor-based M-tile selection (no padding).
    batch, seq, d_model, d_ff = 4, 100, 128, 512

    key = jax.random.PRNGKey(0)
    kx, kp = jax.random.split(key)
    x = jax.random.normal(kx, (batch, seq, d_model), jnp.float32)
    w1, b1, w2, b2 = init_params(kp, d_model, d_ff)

    # Pre-cast weights to bf16 once, outside the forward path.
    w1c, b1c, w2c, b2c = prepare_params(w1, b1, w2, b2)

    # 1) auto path: weights VMEM-resident, single-buffered, direct output write.
    out_resident = feed_forward(x, w1c, b1c, w2c, b2c)
    jax.block_until_ready(out_resident)

    # 2) forced d_ff-tiled reduction path (streamed-weight regime exercise).
    out_tiled = feed_forward(x, w1c, b1c, w2c, b2c, tf=256)
    jax.block_until_ready(out_tiled)

    # Reference in plain JAX with the same bf16 operand rounding (f32 accumulation).
    def reference(x, w1, b1, w2, b2, cdt=jnp.bfloat16):
        f32 = jnp.float32
        hp = jax.lax.Precision.HIGHEST
        xr = x.reshape(-1, d_model).astype(cdt).astype(f32)
        w1r = w1.astype(cdt).astype(f32)
        w2r = w2.astype(cdt).astype(f32)
        h = jnp.dot(xr, w1r, precision=hp) + b1.astype(f32)
        h = 0.5 * h * (1.0 + jax.lax.erf(h * _INV_SQRT2))
        h = h.astype(cdt).astype(f32)
        y = jnp.dot(h, w2r, precision=hp) + b2.astype(f32)
        return y.reshape(x.shape).astype(x.dtype)

    y_ref = reference(x, w1, b1, w2, b2)
    assert out_resident.shape == (batch, seq, d_model)
    assert out_tiled.shape == (batch, seq, d_model)
    assert jnp.allclose(out_resident, y_ref, atol=5e-3, rtol=5e-3), \
        "resident-weight path mismatch vs reference"
    assert jnp.allclose(out_tiled, y_ref, atol=5e-3, rtol=5e-3), \
        "d_ff-tiled path mismatch vs reference"

    print("KERNEL_OK")
</pallas_src>

<mosaic_0001>
module attributes {stable_mosaic.version = 11 : i64} {
  func.func @ffn_kernel_resident(%arg0: i32, %arg1: memref<80x128xbf16, #tpu.memory_space<vmem>>, %arg2: memref<128x512xbf16, #tpu.memory_space<vmem>>, %arg3: memref<1x512xf32, #tpu.memory_space<vmem>>, %arg4: memref<512x128xbf16, #tpu.memory_space<vmem>>, %arg5: memref<1x128xf32, #tpu.memory_space<vmem>>, %arg6: memref<80x128xf32, #tpu.memory_space<vmem>>) attributes {dimension_semantics = [#tpu.dimension_semantics<parallel>], iteration_bounds = array<i64: 5>, scalar_prefetch = 0 : i64, scratch_operands = 0 : i64, tpu.core_type = #tpu.core_type<tc>, window_params = [{transform_indices = @transform_0, window_bounds = array<i64: 80, 128>}, {pipeline_mode = #tpu.pipeline_mode<synchronous>, transform_indices = @transform_1, window_bounds = array<i64: 128, 512>}, {pipeline_mode = #tpu.pipeline_mode<synchronous>, transform_indices = @transform_2, window_bounds = array<i64: 1, 512>}, {pipeline_mode = #tpu.pipeline_mode<synchronous>, transform_indices = @transform_3, window_bounds = array<i64: 512, 128>}, {pipeline_mode = #tpu.pipeline_mode<synchronous>, transform_indices = @transform_4, window_bounds = array<i64: 1, 128>}, {transform_indices = @transform_5, window_bounds = array<i64: 80, 128>}]} {
    %c0 = arith.constant 0 : index
    %c0_0 = arith.constant 0 : index
    %0 = vector.load %arg1[%c0, %c0_0] : memref<80x128xbf16, #tpu.memory_space<vmem>>, vector<80x128xbf16>
    %c0_1 = arith.constant 0 : index
    %c0_2 = arith.constant 0 : index
    %1 = vector.load %arg2[%c0_1, %c0_2] : memref<128x512xbf16, #tpu.memory_space<vmem>>, vector<128x512xbf16>
    %cst = arith.constant dense<0.000000e+00> : vector<80x512xf32>
    %2 = tpu.matmul %0, %1, %cst {dimension_numbers = #tpu.dot_dimension_numbers<[1], [0], [0], [1], [0, 0, 1, 1], [], []>} : vector<80x128xbf16>, vector<128x512xbf16>, vector<80x512xf32> -> vector<80x512xf32>
    %c0_3 = arith.constant 0 : index
    %c0_4 = arith.constant 0 : index
    %3 = vector.load %arg3[%c0_3, %c0_4] : memref<1x512xf32, #tpu.memory_space<vmem>>, vector<1x512xf32>
    %4 = vector.broadcast %3 : vector<1x512xf32> to vector<80x512xf32>
    %5 = arith.addf %2, %4 : vector<80x512xf32>
    %cst_5 = arith.constant 5.000000e-01 : f32
    %6 = vector.broadcast %cst_5 : f32 to vector<80x512xf32>
    %7 = arith.mulf %6, %5 : vector<80x512xf32>
    %cst_6 = arith.constant 0.707106769 : f32
    %8 = vector.broadcast %cst_6 : f32 to vector<80x512xf32>
    %9 = arith.mulf %5, %8 : vector<80x512xf32>
    %10 = math.erf %9 : vector<80x512xf32>
    %cst_7 = arith.constant 1.000000e+00 : f32
    %11 = vector.broadcast %cst_7 : f32 to vector<80x512xf32>
    %12 = arith.addf %11, %10 : vector<80x512xf32>
    %13 = arith.mulf %7, %12 : vector<80x512xf32>
    %14 = arith.truncf %13 : vector<80x512xf32> to vector<80x512xbf16>
    %c0_8 = arith.constant 0 : index
    %c0_9 = arith.constant 0 : index
    %15 = vector.load %arg4[%c0_8, %c0_9] : memref<512x128xbf16, #tpu.memory_space<vmem>>, vector<512x128xbf16>
    %cst_10 = arith.constant dense<0.000000e+00> : vector<80x128xf32>
    %16 = tpu.matmul %14, %15, %cst_10 {dimension_numbers = #tpu.dot_dimension_numbers<[1], [0], [0], [1], [0, 0, 1, 1], [], []>} : vector<80x512xbf16>, vector<512x128xbf16>, vector<80x128xf32> -> vector<80x128xf32>
    %c0_11 = arith.constant 0 : index
    %c0_12 = arith.constant 0 : index
    %17 = vector.load %arg5[%c0_11, %c0_12] : memref<1x128xf32, #tpu.memory_space<vmem>>, vector<1x128xf32>
    %18 = vector.broadcast %17 : vector<1x128xf32> to vector<80x128xf32>
    %19 = arith.addf %16, %18 : vector<80x128xf32>
    %c0_13 = arith.constant 0 : index
    %c0_14 = arith.constant 0 : index
    %20 = vector.load %arg6[%c0_13, %c0_14] : memref<80x128xf32, #tpu.memory_space<vmem>>, vector<80x128xf32>
    tpu.vector_store %arg6[%c0_13, %c0_14], %19 {strides = array<i32>} : memref<80x128xf32, #tpu.memory_space<vmem>>, vector<80x128xf32>,
    return
  }
  func.func @transform_0(%arg0: i32) -> (i32, i32) {
    %c0_i32 = arith.constant 0 : i32
    %c0_i32_0 = arith.constant 0 : i32
    return %arg0, %c0_i32 : i32, i32
  }
  func.func @transform_1(%arg0: i32) -> (i32, i32) {
    %c0_i32 = arith.constant 0 : i32
    %c0_i32_0 = arith.constant 0 : i32
    %c0_i32_1 = arith.constant 0 : i32
    return %c0_i32, %c0_i32_0 : i32, i32
  }
  func.func @transform_2(%arg0: i32) -> (i32, i32) {
    %c0_i32 = arith.constant 0 : i32
    %c0_i32_0 = arith.constant 0 : i32
    %c0_i32_1 = arith.constant 0 : i32
    return %c0_i32, %c0_i32_0 : i32, i32
  }
  func.func @transform_3(%arg0: i32) -> (i32, i32) {
    %c0_i32 = arith.constant 0 : i32
    %c0_i32_0 = arith.constant 0 : i32
    %c0_i32_1 = arith.constant 0 : i32
    return %c0_i32, %c0_i32_0 : i32, i32
  }
  func.func @transform_4(%arg0: i32) -> (i32, i32) {
    %c0_i32 = arith.constant 0 : i32
    %c0_i32_0 = arith.constant 0 : i32
    %c0_i32_1 = arith.constant 0 : i32
    return %c0_i32, %c0_i32_0 : i32, i32
  }
  func.func @transform_5(%arg0: i32) -> (i32, i32) {
    %c0_i32 = arith.constant 0 : i32
    %c0_i32_0 = arith.constant 0 : i32
    return %arg0, %c0_i32 : i32, i32
  }
}

</mosaic_0001>

<llo_original>
// kernel: tpu_custom_call.1
$region0: #{tpu_custom_call.1}
  #allocation0 [shape = 'u32[]', space=smem, size = 0x4, offset = 0x4, fixed_abs, tag = 'smem constant byte address 0x4 - core index']
  #allocation1 [shape = 'u32[72,128]{1,0:T(1,128)}', space=vmem, size = 0x9000, scoped, tag = 'internal scratch']
  %s0 = inlined_call_operand.hbm [shape: bf16[400,128], index: 0, kind: input, shape index: {}]
  %s1 = inlined_call_operand.hbm [shape: bf16[128,512], index: 1, kind: input, shape index: {}]
  %s2 = inlined_call_operand.hbm [shape: f32[1,512], index: 2, kind: input, shape index: {}]
  %s3 = inlined_call_operand.hbm [shape: bf16[512,128], index: 3, kind: input, shape index: {}]
  %s4 = inlined_call_operand.vmem [shape: f32[1,128], index: 4, kind: input, shape index: {}]
  %s5 = inlined_call_operand.hbm [shape: f32[400,128], index: 5, kind: output, shape index: {}]
  %s6 = sld [smem:[#allocation0]]
  $region69: #{tpu_custom_call.1} parent=0
    _
  %s8 = ssub.s32 1, %s6
  %s9 = scalar_select 0, %s8, %s6
  $region1: #{tpu_custom_call.1} parent=0
    #allocation2 [shape = 'u8[40960]{0}', space=vmem, size = 0xa000, scoped, tag = 'input window, operand 0']
    #allocation3 [shape = 's32[2]{0}', space=sflag, size = 0x8, scoped, tag = 'scoped memory for tpu_custom_call.1']
    #allocation4 [shape = 's32[2]{0}', space=sflag, size = 0x8, scoped, tag = 'scoped memory for tpu_custom_call.1']
    #allocation5 [shape = 'u8[131072]{0}', space=vmem, size = 0x20000, scoped, tag = 'input window, operand 1, single buffered']
    #allocation6 [shape = 's32[1]{0}', space=sflag, size = 0x4, scoped, tag = 'scoped memory for tpu_custom_call.1']
    #allocation7 [shape = 'u8[2048]{0}', space=vmem, size = 0x800, scoped, tag = 'input window, operand 2, single buffered']
    #allocation8 [shape = 'u8[131072]{0}', space=vmem, size = 0x20000, scoped, tag = 'input window, operand 3, single buffered']
    #allocation9 [shape = 's32[1]{0}', space=sflag, size = 0x4, scoped, tag = 'scoped memory for tpu_custom_call.1']
    #allocation10 [shape = 'u8[81920]{0}', space=vmem, size = 0x14000, scoped, tag = 'output window, operand 0']
    %10 = vsyncpa [#allocation3], 0
    %s11 = scalar_lea.sflag [#allocation3], 1
    %12 = vsyncpa %s11, 0
    %13 = vsyncpa [#allocation6], 0
    %14 = vsyncpa [#allocation9], 0
    %15 = vsyncpa [#allocation4], 0
    %s16 = scalar_lea.sflag [#allocation4], 1
    %17 = vsyncpa %s16, 0
    loop: start=0, step=1, limit=7
    $region2: #{tpu_custom_call.1} parent=1 // loop_pre_header
      _
    $region3: #{tpu_custom_call.1} parent=1 // loop_header
      %s19 = sphi 0, %s23
      %p20 = scmp.ge.s32.totalorder %s19, 7
      %s29 = sphi 0, %s31
      %s32 = sphi 0, %s29
      %s33 = sphi 0, %s32
      %s49 = sphi 0, %s33
      %s53 = sphi 0, %s53
      %s55 = sphi 0, %s53
      %s56 = sphi 0, %s55
      %s70 = sphi 0, %s56
      %s74 = sphi 0, %s74
      %s76 = sphi 0, %s74
      %s77 = sphi 0, %s76
      %s91 = sphi 0, %s77
      %s95 = sphi 0, %s95
      %s97 = sphi 0, %s95
      %s98 = sphi 0, %s97
      %s112 = sphi 0, %s98
      %s116 = sphi 0, %s116
      %s118 = sphi 0, %s116
      %s119 = sphi 0, %s118
      %s133 = sphi 0, %s119
      %s139 = sphi 0, %s141
      %s142 = sphi 0, %s139
      %s143 = sphi 0, %s142
      %s159 = sphi 0, %s143
    $region4: #{tpu_custom_call.1} parent=1 // loop_header_branch
      %22 = sbr.rel (%p20) target = $region8
    $region5: #{tpu_custom_call.1} parent=1 // loop_body
      %s24 = ssub.s32 %s19, 1
      %s25 = ssub.s32 %s19, 2
      %s26 = sadd.s32 %s19, 1
      %s27 = ssub.s32 %s19, %s26
      %p28 = scmp.eq.s32.totalorder %s27, 0
      %s30 = sadd.s32 %s29, 1
      %s31 = scalar_select %p28, %s29, %s30
      %p34 = pneg %p28
      %p35 = scmp.eq.s32.totalorder %s19, 4
      %p36 = por %p34, %p35
      %p37 = scmp.ne.s32.totalorder %s29, %s32
      %p38 = scmp.eq.s32.totalorder %s19, 0
      %p39 = por %p37, %p38
      %p40 = scmp.ne.s32.totalorder %s29, %s32
      %p41 = scmp.eq.s32.totalorder %s24, 4
      %p42 = por %p40, %p41
      %p43 = scmp.ne.s32.totalorder %s32, %s33
      %p44 = scmp.eq.s32.totalorder %s24, 0
      %p45 = por %p43, %p44
      %p46 = scmp.ne.s32.totalorder %s32, %s33
      %p47 = scmp.eq.s32.totalorder %s25, 4
      %p48 = por %p46, %p47
      %p50 = scmp.ne.s32.totalorder %s33, %s49
      %p51 = scmp.eq.s32.totalorder %s25, 0
      %p52 = por %p50, %p51
      %s54 = sadd.s32 %s53, 1
      %p57 = scmp.eq.s32.totalorder %s19, 4
      %p58 = scmp.ne.s32.totalorder %s53, %s55
      %p59 = scmp.eq.s32.totalorder %s19, 0
      %p60 = por %p58, %p59
      %p61 = scmp.ne.s32.totalorder %s53, %s55
      %p62 = scmp.eq.s32.totalorder %s24, 4
      %p63 = por %p61, %p62
      %p64 = scmp.ne.s32.totalorder %s55, %s56
      %p65 = scmp.eq.s32.totalorder %s24, 0
      %p66 = por %p64, %p65
      %p67 = scmp.ne.s32.totalorder %s55, %s56
      %p68 = scmp.eq.s32.totalorder %s25, 4
      %p69 = por %p67, %p68
      %p71 = scmp.ne.s32.totalorder %s56, %s70
      %p72 = scmp.eq.s32.totalorder %s25, 0
      %p73 = por %p71, %p72
      %s75 = sadd.s32 %s74, 1
      %p78 = scmp.eq.s32.totalorder %s19, 4
      %p79 = scmp.ne.s32.totalorder %s74, %s76
      %p80 = scmp.eq.s32.totalorder %s19, 0
      %p81 = por %p79, %p80
      %p82 = scmp.ne.s32.totalorder %s74, %s76
      %p83 = scmp.eq.s32.totalorder %s24, 4
      %p84 = por %p82, %p83
      %p85 = scmp.ne.s32.totalorder %s76, %s77
      %p86 = scmp.eq.s32.totalorder %s24, 0
      %p87 = por %p85, %p86
      %p88 = scmp.ne.s32.totalorder %s76, %s77
      %p89 = scmp.eq.s32.totalorder %s25, 4
      %p90 = por %p88, %p89
      %p92 = scmp.ne.s32.totalorder %s77, %s91
      %p93 = scmp.eq.s32.totalorder %s25, 0
      %p94 = por %p92, %p93
      %s96 = sadd.s32 %s95, 1
      %p99 = scmp.eq.s32.totalorder %s19, 4
      %p100 = scmp.ne.s32.totalorder %s95, %s97
      %p101 = scmp.eq.s32.totalorder %s19, 0
      %p102 = por %p100, %p101
      %p103 = scmp.ne.s32.totalorder %s95, %s97
      %p104 = scmp.eq.s32.totalorder %s24, 4
      %p105 = por %p103, %p104
      %p106 = scmp.ne.s32.totalorder %s97, %s98
      %p107 = scmp.eq.s32.totalorder %s24, 0
      %p108 = por %p106, %p107
      %p109 = scmp.ne.s32.totalorder %s97, %s98
      %p110 = scmp.eq.s32.totalorder %s25, 4
      %p111 = por %p109, %p110
      %p113 = scmp.ne.s32.totalorder %s98, %s112
      %p114 = scmp.eq.s32.totalorder %s25, 0
      %p115 = por %p113, %p114
      %s117 = sadd.s32 %s116, 1
      %p120 = scmp.eq.s32.totalorder %s19, 4
      %p121 = scmp.ne.s32.totalorder %s116, %s118
      %p122 = scmp.eq.s32.totalorder %s19, 0
      %p123 = por %p121, %p122
      %p124 = scmp.ne.s32.totalorder %s116, %s118
      %p125 = scmp.eq.s32.totalorder %s24, 4
      %p126 = por %p124, %p125
      %p127 = scmp.ne.s32.totalorder %s118, %s119
      %p128 = scmp.eq.s32.totalorder %s24, 0
      %p129 = por %p127, %p128
      %p130 = scmp.ne.s32.totalorder %s118, %s119
      %p131 = scmp.eq.s32.totalorder %s25, 4
      %p132 = por %p130, %p131
      %p134 = scmp.ne.s32.totalorder %s119, %s133
      %p135 = scmp.eq.s32.totalorder %s25, 0
      %p136 = por %p134, %p135
      %s137 = ssub.s32 %s19, %s26
      %p138 = scmp.eq.s32.totalorder %s137, 0
      %s140 = sadd.s32 %s139, 1
      %s141 = scalar_select %p138, %s139, %s140
      %p144 = pneg %p138
      %p145 = scmp.eq.s32.totalorder %s19, 4
      %p146 = por %p144, %p145
      %p147 = scmp.ne.s32.totalorder %s139, %s142
      %p148 = scmp.eq.s32.totalorder %s19, 0
      %p149 = por %p147, %p148
      %p150 = scmp.ne.s32.totalorder %s139, %s142
      %p151 = scmp.eq.s32.totalorder %s24, 4
      %p152 = por %p150, %p151
      %p153 = scmp.ne.s32.totalorder %s142, %s143
      %p154 = scmp.eq.s32.totalorder %s24, 0
      %p155 = por %p153, %p154
      %p156 = scmp.ne.s32.totalorder %s142, %s143
      %p157 = scmp.eq.s32.totalorder %s25, 4
      %p158 = por %p156, %p157
      %p160 = scmp.ne.s32.totalorder %s143, %s159
      %p161 = scmp.eq.s32.totalorder %s25, 0
      %p162 = por %p160, %p161
      %p163 = scmp.le.s32.totalorder 1, %s19
      %p164 = scmp.lt.s32.totalorder %s19, 6
      %p165 = pnand %p163, %p164
      %p166 = pneg %p165
      // Predicated region
      $region9: #{tpu_custom_call.1} parent=5 // pred_check
        _
      $region10: #{tpu_custom_call.1} parent=5 // pred_check_branch
        %168 = sbr.rel (%p165) target = $region12
      $region11: #{tpu_custom_call.1} parent=5 // pred_region
        %s169 = ssub.s32 %s19, 1
        // Predicated region
        $region13: #{tpu_custom_call.1} parent=11 // pred_check
          %p170 = pneg %p66
        $region14: #{tpu_custom_call.1} parent=11 // pred_check_branch
          %172 = sbr.rel (%p170) target = $region16
        $region15: #{tpu_custom_call.1} parent=11 // pred_region
          %174 = vsyncadd [#allocation6], 0
          %s175 = sshll.u32 %s1, 4
          %s176 = int_to_ptr.hbm [resolvable:$true] %s175
          %s177 = sshll.u32 [#allocation5], 4
          %s178 = int_to_ptr.vmem [resolvable:$true] %s177
          %183 = dma.hbm_to_vmem [thread:$0]  %s176, 4096, %s178, [#allocation6], 256, 256, 16
        $region16: #{tpu_custom_call.1} parent=11 // pred_fallthru
          _
        // Predicated region
        $region17: #{tpu_custom_call.1} parent=11 // pred_check
          %p184 = pneg %p87
        $region18: #{tpu_custom_call.1} parent=11 // pred_check_branch
          %186 = sbr.rel (%p184) target = $region20
        $region19: #{tpu_custom_call.1} parent=11 // pred_region
          %188 = vsyncadd [#allocation6], 0
          %s190 = sshll.u32 %s2, 4
          %s191 = int_to_ptr.hbm [resolvable:$true] %s190
          %s192 = sshll.u32 [#allocation7], 4
          %s193 = int_to_ptr.vmem [resolvable:$true] %s192
          %195 = dma.hbm_to_vmem [thread:$0]  %s191, 64, %s193, [#allocation6]
        $region20: #{tpu_custom_call.1} parent=11 // pred_fallthru
          _
        // Predicated region
        $region21: #{tpu_custom_call.1} parent=11 // pred_check
          %p196 = pneg %p108
        $region22: #{tpu_custom_call.1} parent=11 // pred_check_branch
          %198 = sbr.rel (%p196) target = $region24
        $region23: #{tpu_custom_call.1} parent=11 // pred_region
          %200 = vsyncadd [#allocation9], 0
          %s201 = sshll.u32 %s3, 4
          %s202 = int_to_ptr.hbm [resolvable:$true] %s201
          %s203 = sshll.u32 [#allocation8], 4
          %s204 = int_to_ptr.vmem [resolvable:$true] %s203
          %209 = dma.hbm_to_vmem [thread:$0]  %s202, 4096, %s204, [#allocation9], 64, 64, 4
        $region24: #{tpu_custom_call.1} parent=11 // pred_fallthru
          _
        // Predicated region
        $region25: #{tpu_custom_call.1} parent=11 // pred_check
          %p210 = pneg %p129
        $region26: #{tpu_custom_call.1} parent=11 // pred_check_branch
          %212 = sbr.rel (%p210) target = $region28
        $region27: #{tpu_custom_call.1} parent=11 // pred_region
          _
        $region28: #{tpu_custom_call.1} parent=11 // pred_fallthru
          _
      $region12: #{tpu_custom_call.1} parent=5 // pred_fallthru
        _
      %p213 = scmp.lt.s32.totalorder %s19, 5
      // Predicated region
      $region29: #{tpu_custom_call.1} parent=5 // pred_check
        %p214 = pneg %p213
      $region30: #{tpu_custom_call.1} parent=5 // pred_check_branch
        %216 = sbr.rel (%p214) target = $region32
      $region31: #{tpu_custom_call.1} parent=5 // pred_region
        // Predicated region
        $region33: #{tpu_custom_call.1} parent=31 // pred_check
          %p217 = pneg %p39
        $region34: #{tpu_custom_call.1} parent=31 // pred_check_branch
          %219 = sbr.rel (%p217) target = $region36
        $region35: #{tpu_custom_call.1} parent=31 // pred_region
          %s220 = sand.u32 %s29, 1
          %s221 = scalar_lea.sflag [#allocation3], %s220
          %s222 = sand.u32 %s29, 1
          %s223 = smul.addr %s222, 40
          %s224 = scalar_lea.vmem [#allocation2], %s223
          %s225 = smul.u32 10, %s19
          %227 = vsyncadd %s221, 0
          %s228 = smul.addr %s225, 4
          %s229 = scalar_lea.hbm %s0, %s228
          %s230 = sshll.u32 %s229, 4
          %s231 = int_to_ptr.hbm [resolvable:$true] %s230
          %s232 = sshll.u32 %s224, 4
          %s233 = int_to_ptr.vmem [resolvable:$true] %s232
          %238 = dma.hbm_to_vmem [thread:$0]  %s231, 640, %s233, %s221, 64, 64, 4
        $region36: #{tpu_custom_call.1} parent=31 // pred_fallthru
          _
      $region32: #{tpu_custom_call.1} parent=5 // pred_fallthru
        _
      %p239 = scmp.le.s32.totalorder 1, %s19
      %p240 = scmp.lt.s32.totalorder %s19, 6
      %p241 = pnand %p239, %p240
      %p242 = pneg %p241
      // Predicated region
      $region37: #{tpu_custom_call.1} parent=5 // pred_check
        _
      $region38: #{tpu_custom_call.1} parent=5 // pred_check_branch
        %244 = sbr.rel (%p241) target = $region40
      $region39: #{tpu_custom_call.1} parent=5 // pred_region
        %s245 = ssub.s32 %s19, 1
        %s246 = sand.u32 %s32, 1
        %s247 = scalar_lea.sflag [#allocation3], %s246
        %s248 = sand.u32 %s32, 1
        %s249 = smul.addr %s248, 40
        %s250 = scalar_lea.vmem [#allocation2], %s249
        // Predicated region
        $region41: #{tpu_custom_call.1} parent=39 // pred_check
          %p251 = pneg %p45
        $region42: #{tpu_custom_call.1} parent=39 // pred_check_branch
          %253 = sbr.rel (%p251) target = $region44
        $region43: #{tpu_custom_call.1} parent=39 // pred_region
          %255 = dma.done %s247, 640
        $region44: #{tpu_custom_call.1} parent=39 // pred_fallthru
          _
        // Predicated region
        $region45: #{tpu_custom_call.1} parent=39 // pred_check
          %p256 = pneg %p66
        $region46: #{tpu_custom_call.1} parent=39 // pred_check_branch
          %258 = sbr.rel (%p256) target = $region48
        $region47: #{tpu_custom_call.1} parent=39 // pred_region
          %260 = dma.done [#allocation6], 4096
        $region48: #{tpu_custom_call.1} parent=39 // pred_fallthru
          _
        // Predicated region
        $region49: #{tpu_custom_call.1} parent=39 // pred_check
          %p261 = pneg %p87
        $region50: #{tpu_custom_call.1} parent=39 // pred_check_branch
          %263 = sbr.rel (%p261) target = $region52
        $region51: #{tpu_custom_call.1} parent=39 // pred_region
          %265 = dma.done [#allocation6], 64
        $region52: #{tpu_custom_call.1} parent=39 // pred_fallthru
          _
        // Predicated region
        $region53: #{tpu_custom_call.1} parent=39 // pred_check
          %p266 = pneg %p108
        $region54: #{tpu_custom_call.1} parent=39 // pred_check_branch
          %268 = sbr.rel (%p266) target = $region56
        $region55: #{tpu_custom_call.1} parent=39 // pred_region
          %270 = dma.done [#allocation9], 4096
        $region56: #{tpu_custom_call.1} parent=39 // pred_fallthru
          _
        %s271 = sand.u32 %s32, 1
        %s272 = scalar_lea.sflag [#allocation3], %s271
        %s273 = sand.u32 %s32, 1
        %s274 = smul.addr %s273, 40
        %s275 = scalar_lea.vmem [#allocation2], %s274
        %p276 = pneg %p45
        %p277 = pneg %p42
        %p278 = pneg %p66
        %p279 = pneg %p63
        %p280 = pneg %p87
        %p281 = pneg %p84
        %p282 = pneg %p108
        %p283 = pneg %p105
        %p284 = pneg %p129
        %p285 = pneg %p126
        %p286 = pneg %p155
        %p287 = pneg %p152
        %s288 = sand.u32 %s142, 1
        %s289 = scalar_lea.sflag [#allocation4], %s288
        %s290 = sand.u32 %s142, 1
        %s291 = smul.addr %s290, 80
        %s292 = scalar_lea.vmem [#allocation10], %s291
        %s293 = smul.u32 10, %s24
        %s294 = smul.u32 10, %s24
        %v295 = vld [vmem:[%s250] sm:$0xf]
        %v296 = vld [vmem:[%s250 + $0x4] sm:$0xf]
        %v297 = vld [vmem:[%s250 + $0x8] sm:$0xf]
        %v298 = vld [vmem:[%s250 + $0xc] sm:$0xf]
        %v299 = vld [vmem:[%s250 + $0x10] sm:$0xf]
        %v300 = vld [vmem:[%s250 + $0x14] sm:$0xf]
        %v301 = vld [vmem:[%s250 + $0x18] sm:$0xf]
        %v302 = vld [vmem:[%s250 + $0x1c] sm:$0xf]
        %v303 = vld [vmem:[%s250 + $0x20] sm:$0xf]
        %v304 = vld [vmem:[%s250 + $0x24] sm:$0xf]
        %v305 = vld [vmem:[#allocation5] sm:$0xff]
        %v306 = vld [vmem:[#allocation5 + $0x8] sm:$0xff]
        %v307 = vld [vmem:[#allocation5 + $0x10] sm:$0xff]
        %v308 = vld [vmem:[#allocation5 + $0x18] sm:$0xff]
        %v309 = vld [vmem:[#allocation5 + $0x20] sm:$0xff]
        %v310 = vld [vmem:[#allocation5 + $0x28] sm:$0xff]
        %v311 = vld [vmem:[#allocation5 + $0x30] sm:$0xff]
        %v312 = vld [vmem:[#allocation5 + $0x38] sm:$0xff]
        %v313 = vld [vmem:[#allocation5 + $0x40] sm:$0xff]
        %v314 = vld [vmem:[#allocation5 + $0x48] sm:$0xff]
        %v315 = vld [vmem:[#allocation5 + $0x50] sm:$0xff]
        %v316 = vld [vmem:[#allocation5 + $0x58] sm:$0xff]
        %v317 = vld [vmem:[#allocation5 + $0x60] sm:$0xff]
        %v318 = vld [vmem:[#allocation5 + $0x68] sm:$0xff]
        %v319 = vld [vmem:[#allocation5 + $0x70] sm:$0xff]
        %v320 = vld [vmem:[#allocation5 + $0x78] sm:$0xff]
        %v321 = vld [vmem:[#allocation5 + $0x80] sm:$0xff]
        %v322 = vld [vmem:[#allocation5 + $0x88] sm:$0xff]
        %v323 = vld [vmem:[#allocation5 + $0x90] sm:$0xff]
        %v324 = vld [vmem:[#allocation5 + $0x98] sm:$0xff]
        %v325 = vld [vmem:[#allocation5 + $0xa0] sm:$0xff]
        %v326 = vld [vmem:[#allocation5 + $0xa8] sm:$0xff]
        %v327 = vld [vmem:[#allocation5 + $0xb0] sm:$0xff]
        %v328 = vld [vmem:[#allocation5 + $0xb8] sm:$0xff]
        %v329 = vld [vmem:[#allocation5 + $0xc0] sm:$0xff]
        %v330 = vld [vmem:[#allocation5 + $0xc8] sm:$0xff]
        %v331 = vld [vmem:[#allocation5 + $0xd0] sm:$0xff]
        %v332 = vld [vmem:[#allocation5 + $0xd8] sm:$0xff]
        %v333 = vld [vmem:[#allocation5 + $0xe0] sm:$0xff]
        %v334 = vld [vmem:[#allocation5 + $0xe8] sm:$0xff]
        %v335 = vld [vmem:[#allocation5 + $0xf0] sm:$0xff]
        %v336 = vld [vmem:[#allocation5 + $0xf8] sm:$0xff]
        %v337 = vld [vmem:[#allocation7] sm:$0xf]
        %v339 = vperm.slane %v337, 0
        %v340 = vperm.slane %v337, 1
        %v341 = vperm.slane %v337, 2
        %v342 = vperm.slane %v337, 3
        %v357 = vunpack.c.l.b16 %v295
        %v358 = vunpack.c.l.b16 %v296
        %v359 = vunpack.c.l.b16 %v297
        %v360 = vunpack.c.l.b16 %v298
        %v361 = vunpack.c.l.b16 %v299
        %v362 = vunpack.c.l.b16 %v300
        %v363 = vunpack.c.l.b16 %v301
        %v364 = vunpack.c.l.b16 %v302
        %v365 = vunpack.c.l.b16 %v303
        %v366 = vunpack.c.l.b16 %v304
        %v367 = vpack.c.b16 %v358, %v357
        %v368 = vpack.c.b16 %v360, %v359
        %v369 = vpack.c.b16 %v362, %v361
        %v370 = vpack.c.b16 %v364, %v363
        %v371 = vpack.c.b16 %v366, %v365
        %v409 = vunpack.c.l.b16 %v305
        %v410 = vunpack.c.h.b16 %v305
        %v411 = vunpack.c.l.b16 %v306
        %v412 = vunpack.c.h.b16 %v306
        %v413 = vunpack.c.l.b16 %v307
        %v414 = vunpack.c.h.b16 %v307
        %v415 = vunpack.c.l.b16 %v308
        %v416 = vunpack.c.h.b16 %v308
        %v417 = vunpack.c.l.b16 %v309
        %v418 = vunpack.c.h.b16 %v309
        %v419 = vunpack.c.l.b16 %v310
        %v420 = vunpack.c.h.b16 %v310
        %v421 = vunpack.c.l.b16 %v311
        %v422 = vunpack.c.h.b16 %v311
        %v423 = vunpack.c.l.b16 %v312
        %v424 = vunpack.c.h.b16 %v312
        %v425 = vunpack.c.l.b16 %v313
        %v426 = vunpack.c.h.b16 %v313
        %v427 = vunpack.c.l.b16 %v314
        %v428 = vunpack.c.h.b16 %v314
        %v429 = vunpack.c.l.b16 %v315
        %v430 = vunpack.c.h.b16 %v315
        %v431 = vunpack.c.l.b16 %v316
        %v432 = vunpack.c.h.b16 %v316
        %v433 = vunpack.c.l.b16 %v317
        %v434 = vunpack.c.h.b16 %v317
        %v435 = vunpack.c.l.b16 %v318
        %v436 = vunpack.c.h.b16 %v318
        %v437 = vunpack.c.l.b16 %v319
        %v438 = vunpack.c.h.b16 %v319
        %v439 = vunpack.c.l.b16 %v320
        %v440 = vunpack.c.h.b16 %v320
        %v441 = vunpack.c.l.b16 %v321
        %v442 = vunpack.c.h.b16 %v321
        %v443 = vunpack.c.l.b16 %v322
        %v444 = vunpack.c.h.b16 %v322
        %v445 = vunpack.c.l.b16 %v323
        %v446 = vunpack.c.h.b16 %v323
        %v447 = vunpack.c.l.b16 %v324
        %v448 = vunpack.c.h.b16 %v324
        %v449 = vunpack.c.l.b16 %v325
        %v450 = vunpack.c.h.b16 %v325
        %v451 = vunpack.c.l.b16 %v326
        %v452 = vunpack.c.h.b16 %v326
        %v453 = vunpack.c.l.b16 %v327
        %v454 = vunpack.c.h.b16 %v327
        %v455 = vunpack.c.l.b16 %v328
        %v456 = vunpack.c.h.b16 %v328
        %v457 = vunpack.c.l.b16 %v329
        %v458 = vunpack.c.h.b16 %v329
        %v459 = vunpack.c.l.b16 %v330
        %v460 = vunpack.c.h.b16 %v330
        %v461 = vunpack.c.l.b16 %v331
        %v462 = vunpack.c.h.b16 %v331
        %v463 = vunpack.c.l.b16 %v332
        %v464 = vunpack.c.h.b16 %v332
        %v465 = vunpack.c.l.b16 %v333
        %v466 = vunpack.c.h.b16 %v333
        %v467 = vunpack.c.l.b16 %v334
        %v468 = vunpack.c.h.b16 %v334
        %v469 = vunpack.c.l.b16 %v335
        %v470 = vunpack.c.h.b16 %v335
        %v471 = vunpack.c.l.b16 %v336
        %v472 = vunpack.c.h.b16 %v336
        %v473 = vpack.c.b16 %v413, %v409
        %v474 = vpack.c.b16 %v414, %v410
        %v475 = vpack.c.b16 %v415, %v411
        %v476 = vpack.c.b16 %v416, %v412
        %v477 = vpack.c.b16 %v421, %v417
        %v478 = vpack.c.b16 %v422, %v418
        %v479 = vpack.c.b16 %v423, %v419
        %v480 = vpack.c.b16 %v424, %v420
        %v481 = vpack.c.b16 %v429, %v425
        %v482 = vpack.c.b16 %v430, %v426
        %v483 = vpack.c.b16 %v431, %v427
        %v484 = vpack.c.b16 %v432, %v428
        %v485 = vpack.c.b16 %v437, %v433
        %v486 = vpack.c.b16 %v438, %v434
        %v487 = vpack.c.b16 %v439, %v435
        %v488 = vpack.c.b16 %v440, %v436
        %v489 = vpack.c.b16 %v445, %v441
        %v490 = vpack.c.b16 %v446, %v442
        %v491 = vpack.c.b16 %v447, %v443
        %v492 = vpack.c.b16 %v448, %v444
        %v493 = vpack.c.b16 %v453, %v449
        %v494 = vpack.c.b16 %v454, %v450
        %v495 = vpack.c.b16 %v455, %v451
        %v496 = vpack.c.b16 %v456, %v452
        %v497 = vpack.c.b16 %v461, %v457
        %v498 = vpack.c.b16 %v462, %v458
        %v499 = vpack.c.b16 %v463, %v459
        %v500 = vpack.c.b16 %v464, %v460
        %v501 = vpack.c.b16 %v469, %v465
        %v502 = vpack.c.b16 %v470, %v466
        %v503 = vpack.c.b16 %v471, %v467
        %v504 = vpack.c.b16 %v472, %v468
        %537 = vmatpush.bf16.msra.mxu0 %v501
        %538 = vmatpush.bf16.msra.mxu0 %v497
        %539 = vmatpush.bf16.msra.mxu0 %v493
        %540 = vmatpush.bf16.msra.mxu0 %v489
        %541 = vmatpush.bf16.msra.mxu0 %v485
        %542 = vmatpush.bf16.msra.mxu0 %v481
        %543 = vmatpush.bf16.msra.mxu0 %v477
        %544 = vmatpush.bf16.msra.mxu0 %v473
        %545 = vmatmul.bf16.gmra.mxu0 %v367
        %v546 = vpop.f32.mrf.mxu0
        %v547 = vadd.f32 %v339, %v546
        %v548 = vpop.f32.mrf.mxu0
        %v549 = vadd.f32 %v339, %v548
        %550 = vmatmul.bf16.gmra.mxu0 %v368
        %v551 = vpop.f32.mrf.mxu0
        %v552 = vadd.f32 %v339, %v551
        %v553 = vpop.f32.mrf.mxu0
        %v554 = vadd.f32 %v339, %v553
        %555 = vmatmul.bf16.gmra.mxu0 %v369
        %v556 = vpop.f32.mrf.mxu0
        %v557 = vadd.f32 %v339, %v556
        %v558 = vpop.f32.mrf.mxu0
        %v559 = vadd.f32 %v339, %v558
        %560 = vmatmul.bf16.gmra.mxu0 %v370
        %v561 = vpop.f32.mrf.mxu0
        %v562 = vadd.f32 %v339, %v561
        %v563 = vpop.f32.mrf.mxu0
        %v564 = vadd.f32 %v339, %v563
        %565 = vmatmul.bf16.gmra.mxu0 %v371
        %v566 = vpop.f32.mrf.mxu0
        %v567 = vadd.f32 %v339, %v566
        %v568 = vpop.f32.mrf.mxu0
        %v569 = vadd.f32 %v339, %v568
        %570 = vdwg.mxu0
        %571 = vmatpush.bf16.msra.mxu0 %v502
        %572 = vmatpush.bf16.msra.mxu0 %v498
        %573 = vmatpush.bf16.msra.mxu0 %v494
        %574 = vmatpush.bf16.msra.mxu0 %v490
        %575 = vmatpush.bf16.msra.mxu0 %v486
        %576 = vmatpush.bf16.msra.mxu0 %v482
        %577 = vmatpush.bf16.msra.mxu0 %v478
        %578 = vmatpush.bf16.msra.mxu0 %v474
        %579 = vmatmul.bf16.gmra.mxu0 %v367
        %v580 = vpop.f32.mrf.mxu0
        %v581 = vadd.f32 %v340, %v580
        %v582 = vpop.f32.mrf.mxu0
        %v583 = vadd.f32 %v340, %v582
        %584 = vmatmul.bf16.gmra.mxu0 %v368
        %v585 = vpop.f32.mrf.mxu0
        %v586 = vadd.f32 %v340, %v585
        %v587 = vpop.f32.mrf.mxu0
        %v588 = vadd.f32 %v340, %v587
        %589 = vmatmul.bf16.gmra.mxu0 %v369
        %v590 = vpop.f32.mrf.mxu0
        %v591 = vadd.f32 %v340, %v590
        %v592 = vpop.f32.mrf.mxu0
        %v593 = vadd.f32 %v340, %v592
        %594 = vmatmul.bf16.gmra.mxu0 %v370
        %v595 = vpop.f32.mrf.mxu0
        %v596 = vadd.f32 %v340, %v595
        %v597 = vpop.f32.mrf.mxu0
        %v598 = vadd.f32 %v340, %v597
        %599 = vmatmul.bf16.gmra.mxu0 %v371
        %v600 = vpop.f32.mrf.mxu0
        %v601 = vadd.f32 %v340, %v600
        %v602 = vpop.f32.mrf.mxu0
        %v603 = vadd.f32 %v340, %v602
        %604 = vdwg.mxu0
        %605 = vmatpush.bf16.msra.mxu0 %v503
        %606 = vmatpush.bf16.msra.mxu0 %v499
        %607 = vmatpush.bf16.msra.mxu0 %v495
        %608 = vmatpush.bf16.msra.mxu0 %v491
        %609 = vmatpush.bf16.msra.mxu0 %v487
        %610 = vmatpush.bf16.msra.mxu0 %v483
        %611 = vmatpush.bf16.msra.mxu0 %v479
        %612 = vmatpush.bf16.msra.mxu0 %v475
        %613 = vmatmul.bf16.gmra.mxu0 %v367
        %v614 = vpop.f32.mrf.mxu0
        %v615 = vadd.f32 %v341, %v614
        %v616 = vpop.f32.mrf.mxu0
        %v617 = vadd.f32 %v341, %v616
        %618 = vmatmul.bf16.gmra.mxu0 %v368
        %v619 = vpop.f32.mrf.mxu0
        %v620 = vadd.f32 %v341, %v619
        %v621 = vpop.f32.mrf.mxu0
        %v622 = vadd.f32 %v341, %v621
        %623 = vmatmul.bf16.gmra.mxu0 %v369
        %v624 = vpop.f32.mrf.mxu0
        %v625 = vadd.f32 %v341, %v624
        %v626 = vpop.f32.mrf.mxu0
        %v627 = vadd.f32 %v341, %v626
        %628 = vmatmul.bf16.gmra.mxu0 %v370
        %v629 = vpop.f32.mrf.mxu0
        %v630 = vadd.f32 %v341, %v629
        %v631 = vpop.f32.mrf.mxu0
        %v632 = vadd.f32 %v341, %v631
        %633 = vmatmul.bf16.gmra.mxu0 %v371
        %v634 = vpop.f32.mrf.mxu0
        %v635 = vadd.f32 %v341, %v634
        %v636 = vpop.f32.mrf.mxu0
        %v637 = vadd.f32 %v341, %v636
        %638 = vdwg.mxu0
        %639 = vmatpush.bf16.msra.mxu0 %v504
        %640 = vmatpush.bf16.msra.mxu0 %v500
        %641 = vmatpush.bf16.msra.mxu0 %v496
        %642 = vmatpush.bf16.msra.mxu0 %v492
        %643 = vmatpush.bf16.msra.mxu0 %v488
        %644 = vmatpush.bf16.msra.mxu0 %v484
        %645 = vmatpush.bf16.msra.mxu0 %v480
        %646 = vmatpush.bf16.msra.mxu0 %v476
        %647 = vmatmul.bf16.gmra.mxu0 %v367
        %v648 = vpop.f32.mrf.mxu0
        %v649 = vadd.f32 %v342, %v648
        %v650 = vpop.f32.mrf.mxu0
        %v651 = vadd.f32 %v342, %v650
        %652 = vmatmul.bf16.gmra.mxu0 %v368
        %v653 = vpop.f32.mrf.mxu0
        %v654 = vadd.f32 %v342, %v653
        %v655 = vpop.f32.mrf.mxu0
        %v656 = vadd.f32 %v342, %v655
        %657 = vmatmul.bf16.gmra.mxu0 %v369
        %v658 = vpop.f32.mrf.mxu0
        %v659 = vadd.f32 %v342, %v658
        %v660 = vpop.f32.mrf.mxu0
        %v661 = vadd.f32 %v342, %v660
        %662 = vmatmul.bf16.gmra.mxu0 %v370
        %v663 = vpop.f32.mrf.mxu0
        %v664 = vadd.f32 %v342, %v663
        %v665 = vpop.f32.mrf.mxu0
        %v666 = vadd.f32 %v342, %v665
        %667 = vmatmul.bf16.gmra.mxu0 %v371
        %v668 = vpop.f32.mrf.mxu0
        %v669 = vadd.f32 %v342, %v668
        %v670 = vpop.f32.mrf.mxu0
        %v671 = vadd.f32 %v342, %v670
        %672 = vdwg.mxu0
        %v673 = vmul.f32 %v547, 0.5
        %v674 = vmul.f32 %v581, 0.5
        %v675 = vmul.f32 %v615, 0.5
        %v676 = vmul.f32 %v649, 0.5
        %v677 = vmul.f32 %v549, 0.5
        %v678 = vmul.f32 %v583, 0.5
        %v679 = vmul.f32 %v617, 0.5
        %v680 = vmul.f32 %v651, 0.5
        %v681 = vmul.f32 %v552, 0.5
        %v682 = vmul.f32 %v586, 0.5
        %v683 = vmul.f32 %v620, 0.5
        %v684 = vmul.f32 %v654, 0.5
        %v685 = vmul.f32 %v554, 0.5
        %v686 = vmul.f32 %v588, 0.5
        %v687 = vmul.f32 %v622, 0.5
        %v688 = vmul.f32 %v656, 0.5
        %v689 = vmul.f32 %v557, 0.5
        %v690 = vmul.f32 %v591, 0.5
        %v691 = vmul.f32 %v625, 0.5
        %v692 = vmul.f32 %v659, 0.5
        %v693 = vmul.f32 %v559, 0.5
        %v694 = vmul.f32 %v593, 0.5
        %v695 = vmul.f32 %v627, 0.5
        %v696 = vmul.f32 %v661, 0.5
        %v697 = vmul.f32 %v562, 0.5
        %v698 = vmul.f32 %v596, 0.5
        %v699 = vmul.f32 %v630, 0.5
        %v700 = vmul.f32 %v664, 0.5
        %v701 = vmul.f32 %v564, 0.5
        %v702 = vmul.f32 %v598, 0.5
        %v703 = vmul.f32 %v632, 0.5
        %v704 = vmul.f32 %v666, 0.5
        %v705 = vmul.f32 %v567, 0.5
        %v706 = vmul.f32 %v601, 0.5
        %v707 = vmul.f32 %v635, 0.5
        %v708 = vmul.f32 %v669, 0.5
        %v709 = vmul.f32 %v569, 0.5
        %v710 = vmul.f32 %v603, 0.5
        %v711 = vmul.f32 %v637, 0.5
        %v712 = vmul.f32 %v671, 0.5
        %v713 = vmul.f32 %v547, 0.70710677
        %v714 = vmul.f32 %v581, 0.70710677
        %v715 = vmul.f32 %v615, 0.70710677
        %v716 = vmul.f32 %v649, 0.70710677
        %v717 = vmul.f32 %v549, 0.70710677
        %v718 = vmul.f32 %v583, 0.70710677
        %v719 = vmul.f32 %v617, 0.70710677
        %v720 = vmul.f32 %v651, 0.70710677
        %v721 = vmul.f32 %v552, 0.70710677
        %v722 = vmul.f32 %v586, 0.70710677
        %v723 = vmul.f32 %v620, 0.70710677
        %v724 = vmul.f32 %v654, 0.70710677
        %v725 = vmul.f32 %v554, 0.70710677
        %v726 = vmul.f32 %v588, 0.70710677
        %v727 = vmul.f32 %v622, 0.70710677
        %v728 = vmul.f32 %v656, 0.70710677
        %v729 = vmul.f32 %v557, 0.70710677
        %v730 = vmul.f32 %v591, 0.70710677
        %v731 = vmul.f32 %v625, 0.70710677
        %v732 = vmul.f32 %v659, 0.70710677
        %v733 = vmul.f32 %v559, 0.70710677
        %v734 = vmul.f32 %v593, 0.70710677
        %v735 = vmul.f32 %v627, 0.70710677
        %v736 = vmul.f32 %v661, 0.70710677
        %v737 = vmul.f32 %v562, 0.70710677
        %v738 = vmul.f32 %v596, 0.70710677
        %v739 = vmul.f32 %v630, 0.70710677
        %v740 = vmul.f32 %v664, 0.70710677
        %v741 = vmul.f32 %v564, 0.70710677
        %v742 = vmul.f32 %v598, 0.70710677
        %v743 = vmul.f32 %v632, 0.70710677
        %v744 = vmul.f32 %v666, 0.70710677
        %v745 = vmul.f32 %v567, 0.70710677
        %v746 = vmul.f32 %v601, 0.70710677
        %v747 = vmul.f32 %v635, 0.70710677
        %v748 = vmul.f32 %v669, 0.70710677
        %v749 = vmul.f32 %v569, 0.70710677
        %v750 = vmul.f32 %v603, 0.70710677
        %v751 = vmul.f32 %v637, 0.70710677
        %v752 = vmul.f32 %v671, 0.70710677
        %v753 = vmul.f32 %v713, %v713
        %v754 = vmin.f32 16.0, %v753
        %v755 = vmul.f32 %v754, 2.1237322e-06
        %v756 = vadd.f32 %v755, 0.00028619796
        %v757 = vmul.f32 %v754, %v756
        %v758 = vadd.f32 %v757, 0.0036580483
        %v759 = vmul.f32 %v754, %v758
        %v760 = vadd.f32 %v759, 0.05243302
        %v761 = vmul.f32 %v754, %v760
        %v762 = vadd.f32 %v761, 0.18741608
        %v763 = vmul.f32 %v754, %v762
        %v764 = vadd.f32 %v763, 1.1283791
        %v765 = vmul.f32 %v713, %v764
        %v766 = vmul.f32 %v754, 3.8918573e-05
        %v767 = vadd.f32 %v766, 0.001143296
        %v768 = vmul.f32 %v754, %v767
        %v769 = vadd.f32 %v768, 0.014752088
        %v770 = vmul.f32 %v754, %v769
        %v771 = vadd.f32 %v770, 0.112945676
        %v772 = vmul.f32 %v754, %v771
        %v773 = vadd.f32 %v772, 0.4994258
        %v774 = vmul.f32 %v754, %v773
        %v775 = vadd.f32 %v774, 1.0
        %v776 = vrcp.pop %v775
        %v777 = vmul.f32 %v775, %v776
        %v778 = vsub.f32 1.0, %v777
        %v779 = vmul.f32 %v776, %v778
        %v780 = vadd.f32 %v776, %v779
        %vm781 = vweird.f32 %v775
        %vm782 = vweird.f32 %v776
        %vm783 = vmor %vm781, %vm782
        %v784 = vsel %vm783, %v776, %v780
        %v785 = vand.u32 2147483647, %v775
        %vm786 = vcmp.eq.f32.partialorder %v785, 8.507059e+37
        %v787 = vand.u32 %v775, 2147483648
        %v788 = vor.u32 1.1754944e-38, %v787
        %v789 = vsel %vm786, %v788, %v784
        %v790 = vmul.f32 %v765, %v789
        %v791 = vmin.f32 %v790, 1.0
        %v792 = vmax.f32 %v791, -1.0
        %v793 = vmul.f32 %v714, %v714
        %v794 = vmin.f32 16.0, %v793
        %v795 = vmul.f32 %v794, 2.1237322e-06
        %v796 = vadd.f32 %v795, 0.00028619796
        %v797 = vmul.f32 %v794, %v796
        %v798 = vadd.f32 %v797, 0.0036580483
        %v799 = vmul.f32 %v794, %v798
        %v800 = vadd.f32 %v799, 0.05243302
        %v801 = vmul.f32 %v794, %v800
        %v802 = vadd.f32 %v801, 0.18741608
        %v803 = vmul.f32 %v794, %v802
        %v804 = vadd.f32 %v803, 1.1283791
        %v805 = vmul.f32 %v714, %v804
        %v806 = vmul.f32 %v794, 3.8918573e-05
        %v807 = vadd.f32 %v806, 0.001143296
        %v808 = vmul.f32 %v794, %v807
        %v809 = vadd.f32 %v808, 0.014752088
        %v810 = vmul.f32 %v794, %v809
        %v811 = vadd.f32 %v810, 0.112945676
        %v812 = vmul.f32 %v794, %v811
        %v813 = vadd.f32 %v812, 0.4994258
        %v814 = vmul.f32 %v794, %v813
        %v815 = vadd.f32 %v814, 1.0
        %v816 = vrcp.pop %v815
        %v817 = vmul.f32 %v815, %v816
        %v818 = vsub.f32 1.0, %v817
        %v819 = vmul.f32 %v816, %v818
        %v820 = vadd.f32 %v816, %v819
        %vm821 = vweird.f32 %v815
        %vm822 = vweird.f32 %v816
        %vm823 = vmor %vm821, %vm822
        %v824 = vsel %vm823, %v816, %v820
        %v825 = vand.u32 2147483647, %v815
        %vm826 = vcmp.eq.f32.partialorder %v825, 8.507059e+37
        %v827 = vand.u32 %v815, 2147483648
        %v828 = vor.u32 1.1754944e-38, %v827
        %v829 = vsel %vm826, %v828, %v824
        %v830 = vmul.f32 %v805, %v829
        %v831 = vmin.f32 %v830, 1.0
        %v832 = vmax.f32 %v831, -1.0
        %v833 = vmul.f32 %v715, %v715
        %v834 = vmin.f32 16.0, %v833
        %v835 = vmul.f32 %v834, 2.1237322e-06
        %v836 = vadd.f32 %v835, 0.00028619796
        %v837 = vmul.f32 %v834, %v836
        %v838 = vadd.f32 %v837, 0.0036580483
        %v839 = vmul.f32 %v834, %v838
        %v840 = vadd.f32 %v839, 0.05243302
        %v841 = vmul.f32 %v834, %v840
        %v842 = vadd.f32 %v841, 0.18741608
        %v843 = vmul.f32 %v834, %v842
        %v844 = vadd.f32 %v843, 1.1283791
        %v845 = vmul.f32 %v715, %v844
        %v846 = vmul.f32 %v834, 3.8918573e-05
        %v847 = vadd.f32 %v846, 0.001143296
        %v848 = vmul.f32 %v834, %v847
        %v849 = vadd.f32 %v848, 0.014752088
        %v850 = vmul.f32 %v834, %v849
        %v851 = vadd.f32 %v850, 0.112945676
        %v852 = vmul.f32 %v834, %v851
        %v853 = vadd.f32 %v852, 0.4994258
        %v854 = vmul.f32 %v834, %v853
        %v855 = vadd.f32 %v854, 1.0
        %v856 = vrcp.pop %v855
        %v857 = vmul.f32 %v855, %v856
        %v858 = vsub.f32 1.0, %v857
        %v859 = vmul.f32 %v856, %v858
        %v860 = vadd.f32 %v856, %v859
        %vm861 = vweird.f32 %v855
        %vm862 = vweird.f32 %v856
        %vm863 = vmor %vm861, %vm862
        %v864 = vsel %vm863, %v856, %v860
        %v865 = vand.u32 2147483647, %v855
        %vm866 = vcmp.eq.f32.partialorder %v865, 8.507059e+37
        %v867 = vand.u32 %v855, 2147483648
        %v868 = vor.u32 1.1754944e-38, %v867
        %v869 = vsel %vm866, %v868, %v864
        %v870 = vmul.f32 %v845, %v869
        %v871 = vmin.f32 %v870, 1.0
        %v872 = vmax.f32 %v871, -1.0
        %v873 = vmul.f32 %v716, %v716
        %v874 = vmin.f32 16.0, %v873
        %v875 = vmul.f32 %v874, 2.1237322e-06
        %v876 = vadd.f32 %v875, 0.00028619796
        %v877 = vmul.f32 %v874, %v876
        %v878 = vadd.f32 %v877, 0.0036580483
        %v879 = vmul.f32 %v874, %v878
        %v880 = vadd.f32 %v879, 0.05243302
        %v881 = vmul.f32 %v874, %v880
        %v882 = vadd.f32 %v881, 0.18741608
        %v883 = vmul.f32 %v874, %v882
        %v884 = vadd.f32 %v883, 1.1283791
        %v885 = vmul.f32 %v716, %v884
        %v886 = vmul.f32 %v874, 3.8918573e-05
        %v887 = vadd.f32 %v886, 0.001143296
        %v888 = vmul.f32 %v874, %v887
        %v889 = vadd.f32 %v888, 0.014752088
        %v890 = vmul.f32 %v874, %v889
        %v891 = vadd.f32 %v890, 0.112945676
        %v892 = vmul.f32 %v874, %v891
        %v893 = vadd.f32 %v892, 0.4994258
        %v894 = vmul.f32 %v874, %v893
        %v895 = vadd.f32 %v894, 1.0
        %v896 = vrcp.pop %v895
        %v897 = vmul.f32 %v895, %v896
        %v898 = vsub.f32 1.0, %v897
        %v899 = vmul.f32 %v896, %v898
        %v900 = vadd.f32 %v896, %v899
        %vm901 = vweird.f32 %v895
        %vm902 = vweird.f32 %v896
        %vm903 = vmor %vm901, %vm902
        %v904 = vsel %vm903, %v896, %v900
        %v905 = vand.u32 2147483647, %v895
        %vm906 = vcmp.eq.f32.partialorder %v905, 8.507059e+37
        %v907 = vand.u32 %v895, 2147483648
        %v908 = vor.u32 1.1754944e-38, %v907
        %v909 = vsel %vm906, %v908, %v904
        %v910 = vmul.f32 %v885, %v909
        %v911 = vmin.f32 %v910, 1.0
        %v912 = vmax.f32 %v911, -1.0
        %v913 = vmul.f32 %v717, %v717
        %v914 = vmin.f32 16.0, %v913
        %v915 = vmul.f32 %v914, 2.1237322e-06
        %v916 = vadd.f32 %v915, 0.00028619796
        %v917 = vmul.f32 %v914, %v916
        %v918 = vadd.f32 %v917, 0.0036580483
        %v919 = vmul.f32 %v914, %v918
        %v920 = vadd.f32 %v919, 0.05243302
        %v921 = vmul.f32 %v914, %v920
        %v922 = vadd.f32 %v921, 0.18741608
        %v923 = vmul.f32 %v914, %v922
        %v924 = vadd.f32 %v923, 1.1283791
        %v925 = vmul.f32 %v717, %v924
        %v926 = vmul.f32 %v914, 3.8918573e-05
        %v927 = vadd.f32 %v926, 0.001143296
        %v928 = vmul.f32 %v914, %v927
        %v929 = vadd.f32 %v928, 0.014752088
        %v930 = vmul.f32 %v914, %v929
        %v931 = vadd.f32 %v930, 0.112945676
        %v932 = vmul.f32 %v914, %v931
        %v933 = vadd.f32 %v932, 0.4994258
        %v934 = vmul.f32 %v914, %v933
        %v935 = vadd.f32 %v934, 1.0
        %v936 = vrcp.pop %v935
        %v937 = vmul.f32 %v935, %v936
        %v938 = vsub.f32 1.0, %v937
        %v939 = vmul.f32 %v936, %v938
        %v940 = vadd.f32 %v936, %v939
        %vm941 = vweird.f32 %v935
        %vm942 = vweird.f32 %v936
        %vm943 = vmor %vm941, %vm942
        %v944 = vsel %vm943, %v936, %v940
        %v945 = vand.u32 2147483647, %v935
        %vm946 = vcmp.eq.f32.partialorder %v945, 8.507059e+37
        %v947 = vand.u32 %v935, 2147483648
        %v948 = vor.u32 1.1754944e-38, %v947
        %v949 = vsel %vm946, %v948, %v944
        %v950 = vmul.f32 %v925, %v949
        %v951 = vmin.f32 %v950, 1.0
        %v952 = vmax.f32 %v951, -1.0
        %v953 = vmul.f32 %v718, %v718
        %v954 = vmin.f32 16.0, %v953
        %v955 = vmul.f32 %v954, 2.1237322e-06
        %v956 = vadd.f32 %v955, 0.00028619796
        %v957 = vmul.f32 %v954, %v956
        %v958 = vadd.f32 %v957, 0.0036580483
        %v959 = vmul.f32 %v954, %v958
        %v960 = vadd.f32 %v959, 0.05243302
        %v961 = vmul.f32 %v954, %v960
        %v962 = vadd.f32 %v961, 0.18741608
        %v963 = vmul.f32 %v954, %v962
        %v964 = vadd.f32 %v963, 1.1283791
        %v965 = vmul.f32 %v718, %v964
        %v966 = vmul.f32 %v954, 3.8918573e-05
        %v967 = vadd.f32 %v966, 0.001143296
        %v968 = vmul.f32 %v954, %v967
        %v969 = vadd.f32 %v968, 0.014752088
        %v970 = vmul.f32 %v954, %v969
        %v971 = vadd.f32 %v970, 0.112945676
        %v972 = vmul.f32 %v954, %v971
        %v973 = vadd.f32 %v972, 0.4994258
        %v974 = vmul.f32 %v954, %v973
        %v975 = vadd.f32 %v974, 1.0
        %v976 = vrcp.pop %v975
        %v977 = vmul.f32 %v975, %v976
        %v978 = vsub.f32 1.0, %v977
        %v979 = vmul.f32 %v976, %v978
        %v980 = vadd.f32 %v976, %v979
        %vm981 = vweird.f32 %v975
        %vm982 = vweird.f32 %v976
        %vm983 = vmor %vm981, %vm982
        %v984 = vsel %vm983, %v976, %v980
        %v985 = vand.u32 2147483647, %v975
        %vm986 = vcmp.eq.f32.partialorder %v985, 8.507059e+37
        %v987 = vand.u32 %v975, 2147483648
        %v988 = vor.u32 1.1754944e-38, %v987
        %v989 = vsel %vm986, %v988, %v984
        %v990 = vmul.f32 %v965, %v989
        %v991 = vmin.f32 %v990, 1.0
        %v992 = vmax.f32 %v991, -1.0
        %v993 = vmul.f32 %v719, %v719
        %v994 = vmin.f32 16.0, %v993
        %v995 = vmul.f32 %v994, 2.1237322e-06
        %v996 = vadd.f32 %v995, 0.00028619796
        %v997 = vmul.f32 %v994, %v996
        %v998 = vadd.f32 %v997, 0.0036580483
        %v999 = vmul.f32 %v994, %v998
        %v1000 = vadd.f32 %v999, 0.05243302
        %v1001 = vmul.f32 %v994, %v1000
        %v1002 = vadd.f32 %v1001, 0.18741608
        %v1003 = vmul.f32 %v994, %v1002
        %v1004 = vadd.f32 %v1003, 1.1283791
        %v1005 = vmul.f32 %v719, %v1004
        %v1006 = vmul.f32 %v994, 3.8918573e-05
        %v1007 = vadd.f32 %v1006, 0.001143296
        %v1008 = vmul.f32 %v994, %v1007
        %v1009 = vadd.f32 %v1008, 0.014752088
        %v1010 = vmul.f32 %v994, %v1009
        %v1011 = vadd.f32 %v1010, 0.112945676
        %v1012 = vmul.f32 %v994, %v1011
        %v1013 = vadd.f32 %v1012, 0.4994258
        %v1014 = vmul.f32 %v994, %v1013
        %v1015 = vadd.f32 %v1014, 1.0
        %v1016 = vrcp.pop %v1015
        %v1017 = vmul.f32 %v1015, %v1016
        %v1018 = vsub.f32 1.0, %v1017
        %v1019 = vmul.f32 %v1016, %v1018
        %v1020 = vadd.f32 %v1016, %v1019
        %vm1021 = vweird.f32 %v1015
        %vm1022 = vweird.f32 %v1016
        %vm1023 = vmor %vm1021, %vm1022
        %v1024 = vsel %vm1023, %v1016, %v1020
        %v1025 = vand.u32 2147483647, %v1015
        %vm1026 = vcmp.eq.f32.partialorder %v1025, 8.507059e+37
        %v1027 = vand.u32 %v1015, 2147483648
        %v1028 = vor.u32 1.1754944e-38, %v1027
        %v1029 = vsel %vm1026, %v1028, %v1024
        %v1030 = vmul.f32 %v1005, %v1029
        %v1031 = vmin.f32 %v1030, 1.0
        %v1032 = vmax.f32 %v1031, -1.0
        %v1033 = vmul.f32 %v720, %v720
        %v1034 = vmin.f32 16.0, %v1033
        %v1035 = vmul.f32 %v1034, 2.1237322e-06
        %v1036 = vadd.f32 %v1035, 0.00028619796
        %v1037 = vmul.f32 %v1034, %v1036
        %v1038 = vadd.f32 %v1037, 0.0036580483
        %v1039 = vmul.f32 %v1034, %v1038
        %v1040 = vadd.f32 %v1039, 0.05243302
        %v1041 = vmul.f32 %v1034, %v1040
        %v1042 = vadd.f32 %v1041, 0.18741608
        %v1043 = vmul.f32 %v1034, %v1042
        %v1044 = vadd.f32 %v1043, 1.1283791
        %v1045 = vmul.f32 %v720, %v1044
        %v1046 = vmul.f32 %v1034, 3.8918573e-05
        %v1047 = vadd.f32 %v1046, 0.001143296
        %v1048 = vmul.f32 %v1034, %v1047
        %v1049 = vadd.f32 %v1048, 0.014752088
        %v1050 = vmul.f32 %v1034, %v1049
        %v1051 = vadd.f32 %v1050, 0.112945676
        %v1052 = vmul.f32 %v1034, %v1051
        %v1053 = vadd.f32 %v1052, 0.4994258
        %v1054 = vmul.f32 %v1034, %v1053
        %v1055 = vadd.f32 %v1054, 1.0
        %v1056 = vrcp.pop %v1055
        %v1057 = vmul.f32 %v1055, %v1056
        %v1058 = vsub.f32 1.0, %v1057
        %v1059 = vmul.f32 %v1056, %v1058
        %v1060 = vadd.f32 %v1056, %v1059
        %vm1061 = vweird.f32 %v1055
        %vm1062 = vweird.f32 %v1056
        %vm1063 = vmor %vm1061, %vm1062
        %v1064 = vsel %vm1063, %v1056, %v1060
        %v1065 = vand.u32 2147483647, %v1055
        %vm1066 = vcmp.eq.f32.partialorder %v1065, 8.507059e+37
        %v1067 = vand.u32 %v1055, 2147483648
        %v1068 = vor.u32 1.1754944e-38, %v1067
        %v1069 = vsel %vm1066, %v1068, %v1064
        %v1070 = vmul.f32 %v1045, %v1069
        %v1071 = vmin.f32 %v1070, 1.0
        %v1072 = vmax.f32 %v1071, -1.0
        %v1073 = vmul.f32 %v721, %v721
        %v1074 = vmin.f32 16.0, %v1073
        %v1075 = vmul.f32 %v1074, 2.1237322e-06
        %v1076 = vadd.f32 %v1075, 0.00028619796
        %v1077 = vmul.f32 %v1074, %v1076
        %v1078 = vadd.f32 %v1077, 0.0036580483
        %v1079 = vmul.f32 %v1074, %v1078
        %v1080 = vadd.f32 %v1079, 0.05243302
        %v1081 = vmul.f32 %v1074, %v1080
        %v1082 = vadd.f32 %v1081, 0.18741608
        %v1083 = vmul.f32 %v1074, %v1082
        %v1084 = vadd.f32 %v1083, 1.1283791
        %v1085 = vmul.f32 %v721, %v1084
        %v1086 = vmul.f32 %v1074, 3.8918573e-05
        %v1087 = vadd.f32 %v1086, 0.001143296
        %v1088 = vmul.f32 %v1074, %v1087
        %v1089 = vadd.f32 %v1088, 0.014752088
        %v1090 = vmul.f32 %v1074, %v1089
        %v1091 = vadd.f32 %v1090, 0.112945676
        %v1092 = vmul.f32 %v1074, %v1091
        %v1093 = vadd.f32 %v1092, 0.4994258
        %v1094 = vmul.f32 %v1074, %v1093
        %v1095 = vadd.f32 %v1094, 1.0
        %v1096 = vrcp.pop %v1095
        %v1097 = vmul.f32 %v1095, %v1096
        %v1098 = vsub.f32 1.0, %v1097
        %v1099 = vmul.f32 %v1096, %v1098
        %v1100 = vadd.f32 %v1096, %v1099
        %vm1101 = vweird.f32 %v1095
        %vm1102 = vweird.f32 %v1096
        %vm1103 = vmor %vm1101, %vm1102
        %v1104 = vsel %vm1103, %v1096, %v1100
        %v1105 = vand.u32 2147483647, %v1095
        %vm1106 = vcmp.eq.f32.partialorder %v1105, 8.507059e+37
        %v1107 = vand.u32 %v1095, 2147483648
        %v1108 = vor.u32 1.1754944e-38, %v1107
        %v1109 = vsel %vm1106, %v1108, %v1104
        %v1110 = vmul.f32 %v1085, %v1109
        %v1111 = vmin.f32 %v1110, 1.0
        %v1112 = vmax.f32 %v1111, -1.0
        %v1113 = vmul.f32 %v722, %v722
        %v1114 = vmin.f32 16.0, %v1113
        %v1115 = vmul.f32 %v1114, 2.1237322e-06
        %v1116 = vadd.f32 %v1115, 0.00028619796
        %v1117 = vmul.f32 %v1114, %v1116
        %v1118 = vadd.f32 %v1117, 0.0036580483
        %v1119 = vmul.f32 %v1114, %v1118
        %v1120 = vadd.f32 %v1119, 0.05243302
        %v1121 = vmul.f32 %v1114, %v1120
        %v1122 = vadd.f32 %v1121, 0.18741608
        %v1123 = vmul.f32 %v1114, %v1122
        %v1124 = vadd.f32 %v1123, 1.1283791
        %v1125 = vmul.f32 %v722, %v1124
        %v1126 = vmul.f32 %v1114, 3.8918573e-05
        %v1127 = vadd.f32 %v1126, 0.001143296
        %v1128 = vmul.f32 %v1114, %v1127
        %v1129 = vadd.f32 %v1128, 0.014752088
        %v1130 = vmul.f32 %v1114, %v1129
        %v1131 = vadd.f32 %v1130, 0.112945676
        %v1132 = vmul.f32 %v1114, %v1131
        %v1133 = vadd.f32 %v1132, 0.4994258
        %v1134 = vmul.f32 %v1114, %v1133
        %v1135 = vadd.f32 %v1134, 1.0
        %v1136 = vrcp.pop %v1135
        %v1137 = vmul.f32 %v1135, %v1136
        %v1138 = vsub.f32 1.0, %v1137
        %v1139 = vmul.f32 %v1136, %v1138
        %v1140 = vadd.f32 %v1136, %v1139
        %vm1141 = vweird.f32 %v1135
        %vm1142 = vweird.f32 %v1136
        %vm1143 = vmor %vm1141, %vm1142
        %v1144 = vsel %vm1143, %v1136, %v1140
        %v1145 = vand.u32 2147483647, %v1135
        %vm1146 = vcmp.eq.f32.partialorder %v1145, 8.507059e+37
        %v1147 = vand.u32 %v1135, 2147483648
        %v1148 = vor.u32 1.1754944e-38, %v1147
        %v1149 = vsel %vm1146, %v1148, %v1144
        %v1150 = vmul.f32 %v1125, %v1149
        %v1151 = vmin.f32 %v1150, 1.0
        %v1152 = vmax.f32 %v1151, -1.0
        %v1153 = vmul.f32 %v723, %v723
        %v1154 = vmin.f32 16.0, %v1153
        %v1155 = vmul.f32 %v1154, 2.1237322e-06
        %v1156 = vadd.f32 %v1155, 0.00028619796
        %v1157 = vmul.f32 %v1154, %v1156
        %v1158 = vadd.f32 %v1157, 0.0036580483
        %v1159 = vmul.f32 %v1154, %v1158
        %v1160 = vadd.f32 %v1159, 0.05243302
        %v1161 = vmul.f32 %v1154, %v1160
        %v1162 = vadd.f32 %v1161, 0.18741608
        %v1163 = vmul.f32 %v1154, %v1162
        %v1164 = vadd.f32 %v1163, 1.1283791
        %v1165 = vmul.f32 %v723, %v1164
        %v1166 = vmul.f32 %v1154, 3.8918573e-05
        %v1167 = vadd.f32 %v1166, 0.001143296
        %v1168 = vmul.f32 %v1154, %v1167
        %v1169 = vadd.f32 %v1168, 0.014752088
        %v1170 = vmul.f32 %v1154, %v1169
        %v1171 = vadd.f32 %v1170, 0.112945676
        %v1172 = vmul.f32 %v1154, %v1171
        %v1173 = vadd.f32 %v1172, 0.4994258
        %v1174 = vmul.f32 %v1154, %v1173
        %v1175 = vadd.f32 %v1174, 1.0
        %v1176 = vrcp.pop %v1175
        %v1177 = vmul.f32 %v1175, %v1176
        %v1178 = vsub.f32 1.0, %v1177
        %v1179 = vmul.f32 %v1176, %v1178
        %v1180 = vadd.f32 %v1176, %v1179
        %vm1181 = vweird.f32 %v1175
        %vm1182 = vweird.f32 %v1176
        %vm1183 = vmor %vm1181, %vm1182
        %v1184 = vsel %vm1183, %v1176, %v1180
        %v1185 = vand.u32 2147483647, %v1175
        %vm1186 = vcmp.eq.f32.partialorder %v1185, 8.507059e+37
        %v1187 = vand.u32 %v1175, 2147483648
        %v1188 = vor.u32 1.1754944e-38, %v1187
        %v1189 = vsel %vm1186, %v1188, %v1184
        %v1190 = vmul.f32 %v1165, %v1189
        %v1191 = vmin.f32 %v1190, 1.0
        %v1192 = vmax.f32 %v1191, -1.0
        %v1193 = vmul.f32 %v724, %v724
        %v1194 = vmin.f32 16.0, %v1193
        %v1195 = vmul.f32 %v1194, 2.1237322e-06
        %v1196 = vadd.f32 %v1195, 0.00028619796
        %v1197 = vmul.f32 %v1194, %v1196
        %v1198 = vadd.f32 %v1197, 0.0036580483
        %v1199 = vmul.f32 %v1194, %v1198
        %v1200 = vadd.f32 %v1199, 0.05243302
        %v1201 = vmul.f32 %v1194, %v1200
        %v1202 = vadd.f32 %v1201, 0.18741608
        %v1203 = vmul.f32 %v1194, %v1202
        %v1204 = vadd.f32 %v1203, 1.1283791
        %v1205 = vmul.f32 %v724, %v1204
        %v1206 = vmul.f32 %v1194, 3.8918573e-05
        %v1207 = vadd.f32 %v1206, 0.001143296
        %v1208 = vmul.f32 %v1194, %v1207
        %v1209 = vadd.f32 %v1208, 0.014752088
        %v1210 = vmul.f32 %v1194, %v1209
        %v1211 = vadd.f32 %v1210, 0.112945676
        %v1212 = vmul.f32 %v1194, %v1211
        %v1213 = vadd.f32 %v1212, 0.4994258
        %v1214 = vmul.f32 %v1194, %v1213
        %v1215 = vadd.f32 %v1214, 1.0
        %v1216 = vrcp.pop %v1215
        %v1217 = vmul.f32 %v1215, %v1216
        %v1218 = vsub.f32 1.0, %v1217
        %v1219 = vmul.f32 %v1216, %v1218
        %v1220 = vadd.f32 %v1216, %v1219
        %vm1221 = vweird.f32 %v1215
        %vm1222 = vweird.f32 %v1216
        %vm1223 = vmor %vm1221, %vm1222
        %v1224 = vsel %vm1223, %v1216, %v1220
        %v1225 = vand.u32 2147483647, %v1215
        %vm1226 = vcmp.eq.f32.partialorder %v1225, 8.507059e+37
        %v1227 = vand.u32 %v1215, 2147483648
        %v1228 = vor.u32 1.1754944e-38, %v1227
        %v1229 = vsel %vm1226, %v1228, %v1224
        %v1230 = vmul.f32 %v1205, %v1229
        %v1231 = vmin.f32 %v1230, 1.0
        %v1232 = vmax.f32 %v1231, -1.0
        %v1233 = vmul.f32 %v725, %v725
        %v1234 = vmin.f32 16.0, %v1233
        %v1235 = vmul.f32 %v1234, 2.1237322e-06
        %v1236 = vadd.f32 %v1235, 0.00028619796
        %v1237 = vmul.f32 %v1234, %v1236
        %v1238 = vadd.f32 %v1237, 0.0036580483
        %v1239 = vmul.f32 %v1234, %v1238
        %v1240 = vadd.f32 %v1239, 0.05243302
        %v1241 = vmul.f32 %v1234, %v1240
        %v1242 = vadd.f32 %v1241, 0.18741608
        %v1243 = vmul.f32 %v1234, %v1242
        %v1244 = vadd.f32 %v1243, 1.1283791
        %v1245 = vmul.f32 %v725, %v1244
        %v1246 = vmul.f32 %v1234, 3.8918573e-05
        %v1247 = vadd.f32 %v1246, 0.001143296
        %v1248 = vmul.f32 %v1234, %v1247
        %v1249 = vadd.f32 %v1248, 0.014752088
        %v1250 = vmul.f32 %v1234, %v1249
        %v1251 = vadd.f32 %v1250, 0.112945676
        %v1252 = vmul.f32 %v1234, %v1251
        %v1253 = vadd.f32 %v1252, 0.4994258
        %v1254 = vmul.f32 %v1234, %v1253
        %v1255 = vadd.f32 %v1254, 1.0
        %v1256 = vrcp.pop %v1255
        %v1257 = vmul.f32 %v1255, %v1256
        %v1258 = vsub.f32 1.0, %v1257
        %v1259 = vmul.f32 %v1256, %v1258
        %v1260 = vadd.f32 %v1256, %v1259
        %vm1261 = vweird.f32 %v1255
        %vm1262 = vweird.f32 %v1256
        %vm1263 = vmor %vm1261, %vm1262
        %v1264 = vsel %vm1263, %v1256, %v1260
        %v1265 = vand.u32 2147483647, %v1255
        %vm1266 = vcmp.eq.f32.partialorder %v1265, 8.507059e+37
        %v1267 = vand.u32 %v1255, 2147483648
        %v1268 = vor.u32 1.1754944e-38, %v1267
        %v1269 = vsel %vm1266, %v1268, %v1264
        %v1270 = vmul.f32 %v1245, %v1269
        %v1271 = vmin.f32 %v1270, 1.0
        %v1272 = vmax.f32 %v1271, -1.0
        %v1273 = vmul.f32 %v726, %v726
        %v1274 = vmin.f32 16.0, %v1273
        %v1275 = vmul.f32 %v1274, 2.1237322e-06
        %v1276 = vadd.f32 %v1275, 0.00028619796
        %v1277 = vmul.f32 %v1274, %v1276
        %v1278 = vadd.f32 %v1277, 0.0036580483
        %v1279 = vmul.f32 %v1274, %v1278
        %v1280 = vadd.f32 %v1279, 0.05243302
        %v1281 = vmul.f32 %v1274, %v1280
        %v1282 = vadd.f32 %v1281, 0.18741608
        %v1283 = vmul.f32 %v1274, %v1282
        %v1284 = vadd.f32 %v1283, 1.1283791
        %v1285 = vmul.f32 %v726, %v1284
        %v1286 = vmul.f32 %v1274, 3.8918573e-05
        %v1287 = vadd.f32 %v1286, 0.001143296
        %v1288 = vmul.f32 %v1274, %v1287
        %v1289 = vadd.f32 %v1288, 0.014752088
        %v1290 = vmul.f32 %v1274, %v1289
        %v1291 = vadd.f32 %v1290, 0.112945676
        %v1292 = vmul.f32 %v1274, %v1291
        %v1293 = vadd.f32 %v1292, 0.4994258
        %v1294 = vmul.f32 %v1274, %v1293
        %v1295 = vadd.f32 %v1294, 1.0
        %v1296 = vrcp.pop %v1295
        %v1297 = vmul.f32 %v1295, %v1296
        %v1298 = vsub.f32 1.0, %v1297
        %v1299 = vmul.f32 %v1296, %v1298
        %v1300 = vadd.f32 %v1296, %v1299
        %vm1301 = vweird.f32 %v1295
        %vm1302 = vweird.f32 %v1296
        %vm1303 = vmor %vm1301, %vm1302
        %v1304 = vsel %vm1303, %v1296, %v1300
        %v1305 = vand.u32 2147483647, %v1295
        %vm1306 = vcmp.eq.f32.partialorder %v1305, 8.507059e+37
        %v1307 = vand.u32 %v1295, 2147483648
        %v1308 = vor.u32 1.1754944e-38, %v1307
        %v1309 = vsel %vm1306, %v1308, %v1304
        %v1310 = vmul.f32 %v1285, %v1309
        %v1311 = vmin.f32 %v1310, 1.0
        %v1312 = vmax.f32 %v1311, -1.0
        %v1313 = vmul.f32 %v727, %v727
        %v1314 = vmin.f32 16.0, %v1313
        %v1315 = vmul.f32 %v1314, 2.1237322e-06
        %v1316 = vadd.f32 %v1315, 0.00028619796
        %v1317 = vmul.f32 %v1314, %v1316
        %v1318 = vadd.f32 %v1317, 0.0036580483
        %v1319 = vmul.f32 %v1314, %v1318
        %v1320 = vadd.f32 %v1319, 0.05243302
        %v1321 = vmul.f32 %v1314, %v1320
        %v1322 = vadd.f32 %v1321, 0.18741608
        %v1323 = vmul.f32 %v1314, %v1322
        %v1324 = vadd.f32 %v1323, 1.1283791
        %v1325 = vmul.f32 %v727, %v1324
        %v1326 = vmul.f32 %v1314, 3.8918573e-05
        %v1327 = vadd.f32 %v1326, 0.001143296
        %v1328 = vmul.f32 %v1314, %v1327
        %v1329 = vadd.f32 %v1328, 0.014752088
        %v1330 = vmul.f32 %v1314, %v1329
        %v1331 = vadd.f32 %v1330, 0.112945676
        %v1332 = vmul.f32 %v1314, %v1331
        %v1333 = vadd.f32 %v1332, 0.4994258
        %v1334 = vmul.f32 %v1314, %v1333
        %v1335 = vadd.f32 %v1334, 1.0
        %v1336 = vrcp.pop %v1335
        %v1337 = vmul.f32 %v1335, %v1336
        %v1338 = vsub.f32 1.0, %v1337
        %v1339 = vmul.f32 %v1336, %v1338
        %v1340 = vadd.f32 %v1336, %v1339
        %vm1341 = vweird.f32 %v1335
        %vm1342 = vweird.f32 %v1336
        %vm1343 = vmor %vm1341, %vm1342
        %v1344 = vsel %vm1343, %v1336, %v1340
        %v1345 = vand.u32 2147483647, %v1335
        %vm1346 = vcmp.eq.f32.partialorder %v1345, 8.507059e+37
        %v1347 = vand.u32 %v1335, 2147483648
        %v1348 = vor.u32 1.1754944e-38, %v1347
        %v1349 = vsel %vm1346, %v1348, %v1344
        %v1350 = vmul.f32 %v1325, %v1349
        %v1351 = vmin.f32 %v1350, 1.0
        %v1352 = vmax.f32 %v1351, -1.0
        %v1353 = vmul.f32 %v728, %v728
        %v1354 = vmin.f32 16.0, %v1353
        %v1355 = vmul.f32 %v1354, 2.1237322e-06
        %v1356 = vadd.f32 %v1355, 0.00028619796
        %v1357 = vmul.f32 %v1354, %v1356
        %v1358 = vadd.f32 %v1357, 0.0036580483
        %v1359 = vmul.f32 %v1354, %v1358
        %v1360 = vadd.f32 %v1359, 0.05243302
        %v1361 = vmul.f32 %v1354, %v1360
        %v1362 = vadd.f32 %v1361, 0.18741608
        %v1363 = vmul.f32 %v1354, %v1362
        %v1364 = vadd.f32 %v1363, 1.1283791
        %v1365 = vmul.f32 %v728, %v1364
        %v1366 = vmul.f32 %v1354, 3.8918573e-05
        %v1367 = vadd.f32 %v1366, 0.001143296
        %v1368 = vmul.f32 %v1354, %v1367
        %v1369 = vadd.f32 %v1368, 0.014752088
        %v1370 = vmul.f32 %v1354, %v1369
        %v1371 = vadd.f32 %v1370, 0.112945676
        %v1372 = vmul.f32 %v1354, %v1371
        %v1373 = vadd.f32 %v1372, 0.4994258
        %v1374 = vmul.f32 %v1354, %v1373
        %v1375 = vadd.f32 %v1374, 1.0
        %v1376 = vrcp.pop %v1375
        %v1377 = vmul.f32 %v1375, %v1376
        %v1378 = vsub.f32 1.0, %v1377
        %v1379 = vmul.f32 %v1376, %v1378
        %v1380 = vadd.f32 %v1376, %v1379
        %vm1381 = vweird.f32 %v1375
        %vm1382 = vweird.f32 %v1376
        %vm1383 = vmor %vm1381, %vm1382
        %v1384 = vsel %vm1383, %v1376, %v1380
        %v1385 = vand.u32 2147483647, %v1375
        %vm1386 = vcmp.eq.f32.partialorder %v1385, 8.507059e+37
        %v1387 = vand.u32 %v1375, 2147483648
        %v1388 = vor.u32 1.1754944e-38, %v1387
        %v1389 = vsel %vm1386, %v1388, %v1384
        %v1390 = vmul.f32 %v1365, %v1389
        %v1391 = vmin.f32 %v1390, 1.0
        %v1392 = vmax.f32 %v1391, -1.0
        %v1393 = vmul.f32 %v729, %v729
        %v1394 = vmin.f32 16.0, %v1393
        %v1395 = vmul.f32 %v1394, 2.1237322e-06
        %v1396 = vadd.f32 %v1395, 0.00028619796
        %v1397 = vmul.f32 %v1394, %v1396
        %v1398 = vadd.f32 %v1397, 0.0036580483
        %v1399 = vmul.f32 %v1394, %v1398
        %v1400 = vadd.f32 %v1399, 0.05243302
        %v1401 = vmul.f32 %v1394, %v1400
        %v1402 = vadd.f32 %v1401, 0.18741608
        %v1403 = vmul.f32 %v1394, %v1402
        %v1404 = vadd.f32 %v1403, 1.1283791
        %v1405 = vmul.f32 %v729, %v1404
        %v1406 = vmul.f32 %v1394, 3.8918573e-05
        %v1407 = vadd.f32 %v1406, 0.001143296
        %v1408 = vmul.f32 %v1394, %v1407
        %v1409 = vadd.f32 %v1408, 0.014752088
        %v1410 = vmul.f32 %v1394, %v1409
        %v1411 = vadd.f32 %v1410, 0.112945676
        %v1412 = vmul.f32 %v1394, %v1411
        %v1413 = vadd.f32 %v1412, 0.4994258
        %v1414 = vmul.f32 %v1394, %v1413
        %v1415 = vadd.f32 %v1414, 1.0
        %v1416 = vrcp.pop %v1415
        %v1417 = vmul.f32 %v1415, %v1416
        %v1418 = vsub.f32 1.0, %v1417
        %v1419 = vmul.f32 %v1416, %v1418
        %v1420 = vadd.f32 %v1416, %v1419
        %vm1421 = vweird.f32 %v1415
        %vm1422 = vweird.f32 %v1416
        %vm1423 = vmor %vm1421, %vm1422
        %v1424 = vsel %vm1423, %v1416, %v1420
        %v1425 = vand.u32 2147483647, %v1415
        %vm1426 = vcmp.eq.f32.partialorder %v1425, 8.507059e+37
        %v1427 = vand.u32 %v1415, 2147483648
        %v1428 = vor.u32 1.1754944e-38, %v1427
        %v1429 = vsel %vm1426, %v1428, %v1424
        %v1430 = vmul.f32 %v1405, %v1429
        %v1431 = vmin.f32 %v1430, 1.0
        %v1432 = vmax.f32 %v1431, -1.0
        %v1433 = vmul.f32 %v730, %v730
        %v1434 = vmin.f32 16.0, %v1433
        %v1435 = vmul.f32 %v1434, 2.1237322e-06
        %v1436 = vadd.f32 %v1435, 0.00028619796
        %v1437 = vmul.f32 %v1434, %v1436
        %v1438 = vadd.f32 %v1437, 0.0036580483
        %v1439 = vmul.f32 %v1434, %v1438
        %v1440 = vadd.f32 %v1439, 0.05243302
        %v1441 = vmul.f32 %v1434, %v1440
        %v1442 = vadd.f32 %v1441, 0.18741608
        %v1443 = vmul.f32 %v1434, %v1442
        %v1444 = vadd.f32 %v1443, 1.1283791
        %v1445 = vmul.f32 %v730, %v1444
        %v1446 = vmul.f32 %v1434, 3.8918573e-05
        %v1447 = vadd.f32 %v1446, 0.001143296
        %v1448 = vmul.f32 %v1434, %v1447
        %v1449 = vadd.f32 %v1448, 0.014752088
        %v1450 = vmul.f32 %v1434, %v1449
        %v1451 = vadd.f32 %v1450, 0.112945676
        %v1452 = vmul.f32 %v1434, %v1451
        %v1453 = vadd.f32 %v1452, 0.4994258
        %v1454 = vmul.f32 %v1434, %v1453
        %v1455 = vadd.f32 %v1454, 1.0
        %v1456 = vrcp.pop %v1455
        %v1457 = vmul.f32 %v1455, %v1456
        %v1458 = vsub.f32 1.0, %v1457
        %v1459 = vmul.f32 %v1456, %v1458
        %v1460 = vadd.f32 %v1456, %v1459
        %vm1461 = vweird.f32 %v1455
        %vm1462 = vweird.f32 %v1456
        %vm1463 = vmor %vm1461, %vm1462
        %v1464 = vsel %vm1463, %v1456, %v1460
        %v1465 = vand.u32 2147483647, %v1455
        %vm1466 = vcmp.eq.f32.partialorder %v1465, 8.507059e+37
        %v1467 = vand.u32 %v1455, 2147483648
        %v1468 = vor.u32 1.1754944e-38, %v1467
        %v1469 = vsel %vm1466, %v1468, %v1464
        %v1470 = vmul.f32 %v1445, %v1469
        %v1471 = vmin.f32 %v1470, 1.0
        %v1472 = vmax.f32 %v1471, -1.0
        %v1473 = vmul.f32 %v731, %v731
        %v1474 = vmin.f32 16.0, %v1473
        %v1475 = vmul.f32 %v1474, 2.1237322e-06
        %v1476 = vadd.f32 %v1475, 0.00028619796
        %v1477 = vmul.f32 %v1474, %v1476
        %v1478 = vadd.f32 %v1477, 0.0036580483
        %v1479 = vmul.f32 %v1474, %v1478
        %v1480 = vadd.f32 %v1479, 0.05243302
        %v1481 = vmul.f32 %v1474, %v1480
        %v1482 = vadd.f32 %v1481, 0.18741608
        %v1483 = vmul.f32 %v1474, %v1482
        %v1484 = vadd.f32 %v1483, 1.1283791
        %v1485 = vmul.f32 %v731, %v1484
        %v1486 = vmul.f32 %v1474, 3.8918573e-05
        %v1487 = vadd.f32 %v1486, 0.001143296
        %v1488 = vmul.f32 %v1474, %v1487
        %v1489 = vadd.f32 %v1488, 0.014752088
        %v1490 = vmul.f32 %v1474, %v1489
        %v1491 = vadd.f32 %v1490, 0.112945676
        %v1492 = vmul.f32 %v1474, %v1491
        %v1493 = vadd.f32 %v1492, 0.4994258
        %v1494 = vmul.f32 %v1474, %v1493
        %v1495 = vadd.f32 %v1494, 1.0
        %v1496 = vrcp.pop %v1495
        %v1497 = vmul.f32 %v1495, %v1496
        %v1498 = vsub.f32 1.0, %v1497
        %v1499 = vmul.f32 %v1496, %v1498
        %v1500 = vadd.f32 %v1496, %v1499
        %vm1501 = vweird.f32 %v1495
        %vm1502 = vweird.f32 %v1496
        %vm1503 = vmor %vm1501, %vm1502
        %v1504 = vsel %vm1503, %v1496, %v1500
        %v1505 = vand.u32 2147483647, %v1495
        %vm1506 = vcmp.eq.f32.partialorder %v1505, 8.507059e+37
        %v1507 = vand.u32 %v1495, 2147483648
        %v1508 = vor.u32 1.1754944e-38, %v1507
        %v1509 = vsel %vm1506, %v1508, %v1504
        %v1510 = vmul.f32 %v1485, %v1509
        %v1511 = vmin.f32 %v1510, 1.0
        %v1512 = vmax.f32 %v1511, -1.0
        %v1513 = vmul.f32 %v732, %v732
        %v1514 = vmin.f32 16.0, %v1513
        %v1515 = vmul.f32 %v1514, 2.1237322e-06
        %v1516 = vadd.f32 %v1515, 0.00028619796
        %v1517 = vmul.f32 %v1514, %v1516
        %v1518 = vadd.f32 %v1517, 0.0036580483
        %v1519 = vmul.f32 %v1514, %v1518
        %v1520 = vadd.f32 %v1519, 0.05243302
        %v1521 = vmul.f32 %v1514, %v1520
        %v1522 = vadd.f32 %v1521, 0.18741608
        %v1523 = vmul.f32 %v1514, %v1522
        %v1524 = vadd.f32 %v1523, 1.1283791
        %v1525 = vmul.f32 %v732, %v1524
        %v1526 = vmul.f32 %v1514, 3.8918573e-05
        %v1527 = vadd.f32 %v1526, 0.001143296
        %v1528 = vmul.f32 %v1514, %v1527
        %v1529 = vadd.f32 %v1528, 0.014752088
        %v1530 = vmul.f32 %v1514, %v1529
        %v1531 = vadd.f32 %v1530, 0.112945676
        %v1532 = vmul.f32 %v1514, %v1531
        %v1533 = vadd.f32 %v1532, 0.4994258
        %v1534 = vmul.f32 %v1514, %v1533
        %v1535 = vadd.f32 %v1534, 1.0
        %v1536 = vrcp.pop %v1535
        %v1537 = vmul.f32 %v1535, %v1536
        %v1538 = vsub.f32 1.0, %v1537
        %v1539 = vmul.f32 %v1536, %v1538
        %v1540 = vadd.f32 %v1536, %v1539
        %vm1541 = vweird.f32 %v1535
        %vm1542 = vweird.f32 %v1536
        %vm1543 = vmor %vm1541, %vm1542
        %v1544 = vsel %vm1543, %v1536, %v1540
        %v1545 = vand.u32 2147483647, %v1535
        %vm1546 = vcmp.eq.f32.partialorder %v1545, 8.507059e+37
        %v1547 = vand.u32 %v1535, 2147483648
        %v1548 = vor.u32 1.1754944e-38, %v1547
        %v1549 = vsel %vm1546, %v1548, %v1544
        %v1550 = vmul.f32 %v1525, %v1549
        %v1551 = vmin.f32 %v1550, 1.0
        %v1552 = vmax.f32 %v1551, -1.0
        %v1553 = vmul.f32 %v733, %v733
        %v1554 = vmin.f32 16.0, %v1553
        %v1555 = vmul.f32 %v1554, 2.1237322e-06
        %v1556 = vadd.f32 %v1555, 0.00028619796
        %v1557 = vmul.f32 %v1554, %v1556
        %v1558 = vadd.f32 %v1557, 0.0036580483
        %v1559 = vmul.f32 %v1554, %v1558
        %v1560 = vadd.f32 %v1559, 0.05243302
        %v1561 = vmul.f32 %v1554, %v1560
        %v1562 = vadd.f32 %v1561, 0.18741608
        %v1563 = vmul.f32 %v1554, %v1562
        %v1564 = vadd.f32 %v1563, 1.1283791
        %v1565 = vmul.f32 %v733, %v1564
        %v1566 = vmul.f32 %v1554, 3.8918573e-05
        %v1567 = vadd.f32 %v1566, 0.001143296
        %v1568 = vmul.f32 %v1554, %v1567
        %v1569 = vadd.f32 %v1568, 0.014752088
        %v1570 = vmul.f32 %v1554, %v1569
        %v1571 = vadd.f32 %v1570, 0.112945676
        %v1572 = vmul.f32 %v1554, %v1571
        %v1573 = vadd.f32 %v1572, 0.4994258
        %v1574 = vmul.f32 %v1554, %v1573
        %v1575 = vadd.f32 %v1574, 1.0
        %v1576 = vrcp.pop %v1575
        %v1577 = vmul.f32 %v1575, %v1576
        %v1578 = vsub.f32 1.0, %v1577
        %v1579 = vmul.f32 %v1576, %v1578
        %v1580 = vadd.f32 %v1576, %v1579
        %vm1581 = vweird.f32 %v1575
        %vm1582 = vweird.f32 %v1576
        %vm1583 = vmor %vm1581, %vm1582
        %v1584 = vsel %vm1583, %v1576, %v1580
        %v1585 = vand.u32 2147483647, %v1575
        %vm1586 = vcmp.eq.f32.partialorder %v1585, 8.507059e+37
        %v1587 = vand.u32 %v1575, 2147483648
        %v1588 = vor.u32 1.1754944e-38, %v1587
        %v1589 = vsel %vm1586, %v1588, %v1584
        %v1590 = vmul.f32 %v1565, %v1589
        %v1591 = vmin.f32 %v1590, 1.0
        %v1592 = vmax.f32 %v1591, -1.0
        %v1593 = vmul.f32 %v734, %v734
        %v1594 = vmin.f32 16.0, %v1593
        %v1595 = vmul.f32 %v1594, 2.1237322e-06
        %v1596 = vadd.f32 %v1595, 0.00028619796
        %v1597 = vmul.f32 %v1594, %v1596
        %v1598 = vadd.f32 %v1597, 0.0036580483
        %v1599 = vmul.f32 %v1594, %v1598
        %v1600 = vadd.f32 %v1599, 0.05243302
        %v1601 = vmul.f32 %v1594, %v1600
        %v1602 = vadd.f32 %v1601, 0.18741608
        %v1603 = vmul.f32 %v1594, %v1602
        %v1604 = vadd.f32 %v1603, 1.1283791
        %v1605 = vmul.f32 %v734, %v1604
        %v1606 = vmul.f32 %v1594, 3.8918573e-05
        %v1607 = vadd.f32 %v1606, 0.001143296
        %v1608 = vmul.f32 %v1594, %v1607
        %v1609 = vadd.f32 %v1608, 0.014752088
        %v1610 = vmul.f32 %v1594, %v1609
        %v1611 = vadd.f32 %v1610, 0.112945676
        %v1612 = vmul.f32 %v1594, %v1611
        %v1613 = vadd.f32 %v1612, 0.4994258
        %v1614 = vmul.f32 %v1594, %v1613
        %v1615 = vadd.f32 %v1614, 1.0
        %v1616 = vrcp.pop %v1615
        %v1617 = vmul.f32 %v1615, %v1616
        %v1618 = vsub.f32 1.0, %v1617
        %v1619 = vmul.f32 %v1616, %v1618
        %v1620 = vadd.f32 %v1616, %v1619
        %vm1621 = vweird.f32 %v1615
        %vm1622 = vweird.f32 %v1616
        %vm1623 = vmor %vm1621, %vm1622
        %v1624 = vsel %vm1623, %v1616, %v1620
        %v1625 = vand.u32 2147483647, %v1615
        %vm1626 = vcmp.eq.f32.partialorder %v1625, 8.507059e+37
        %v1627 = vand.u32 %v1615, 2147483648
        %v1628 = vor.u32 1.1754944e-38, %v1627
        %v1629 = vsel %vm1626, %v1628, %v1624
        %v1630 = vmul.f32 %v1605, %v1629
        %v1631 = vmin.f32 %v1630, 1.0
        %v1632 = vmax.f32 %v1631, -1.0
        %v1633 = vmul.f32 %v735, %v735
        %v1634 = vmin.f32 16.0, %v1633
        %v1635 = vmul.f32 %v1634, 2.1237322e-06
        %v1636 = vadd.f32 %v1635, 0.00028619796
        %v1637 = vmul.f32 %v1634, %v1636
        %v1638 = vadd.f32 %v1637, 0.0036580483
        %v1639 = vmul.f32 %v1634, %v1638
        %v1640 = vadd.f32 %v1639, 0.05243302
        %v1641 = vmul.f32 %v1634, %v1640
        %v1642 = vadd.f32 %v1641, 0.18741608
        %v1643 = vmul.f32 %v1634, %v1642
        %v1644 = vadd.f32 %v1643, 1.1283791
        %v1645 = vmul.f32 %v735, %v1644
        %v1646 = vmul.f32 %v1634, 3.8918573e-05
        %v1647 = vadd.f32 %v1646, 0.001143296
        %v1648 = vmul.f32 %v1634, %v1647
        %v1649 = vadd.f32 %v1648, 0.014752088
        %v1650 = vmul.f32 %v1634, %v1649
        %v1651 = vadd.f32 %v1650, 0.112945676
        %v1652 = vmul.f32 %v1634, %v1651
        %v1653 = vadd.f32 %v1652, 0.4994258
        %v1654 = vmul.f32 %v1634, %v1653
        %v1655 = vadd.f32 %v1654, 1.0
        %v1656 = vrcp.pop %v1655
        %v1657 = vmul.f32 %v1655, %v1656
        %v1658 = vsub.f32 1.0, %v1657
        %v1659 = vmul.f32 %v1656, %v1658
        %v1660 = vadd.f32 %v1656, %v1659
        %vm1661 = vweird.f32 %v1655
        %vm1662 = vweird.f32 %v1656
        %vm1663 = vmor %vm1661, %vm1662
        %v1664 = vsel %vm1663, %v1656, %v1660
        %v1665 = vand.u32 2147483647, %v1655
        %vm1666 = vcmp.eq.f32.partialorder %v1665, 8.507059e+37
        %v1667 = vand.u32 %v1655, 2147483648
        %v1668 = vor.u32 1.1754944e-38, %v1667
        %v1669 = vsel %vm1666, %v1668, %v1664
        %v1670 = vmul.f32 %v1645, %v1669
        %v1671 = vmin.f32 %v1670, 1.0
        %v1672 = vmax.f32 %v1671, -1.0
        %v1673 = vmul.f32 %v736, %v736
        %v1674 = vmin.f32 16.0, %v1673
        %v1675 = vmul.f32 %v1674, 2.1237322e-06
        %v1676 = vadd.f32 %v1675, 0.00028619796
        %v1677 = vmul.f32 %v1674, %v1676
        %v1678 = vadd.f32 %v1677, 0.0036580483
        %v1679 = vmul.f32 %v1674, %v1678
        %v1680 = vadd.f32 %v1679, 0.05243302
        %v1681 = vmul.f32 %v1674, %v1680
        %v1682 = vadd.f32 %v1681, 0.18741608
        %v1683 = vmul.f32 %v1674, %v1682
        %v1684 = vadd.f32 %v1683, 1.1283791
        %v1685 = vmul.f32 %v736, %v1684
        %v1686 = vmul.f32 %v1674, 3.8918573e-05
        %v1687 = vadd.f32 %v1686, 0.001143296
        %v1688 = vmul.f32 %v1674, %v1687
        %v1689 = vadd.f32 %v1688, 0.014752088
        %v1690 = vmul.f32 %v1674, %v1689
        %v1691 = vadd.f32 %v1690, 0.112945676
        %v1692 = vmul.f32 %v1674, %v1691
        %v1693 = vadd.f32 %v1692, 0.4994258
        %v1694 = vmul.f32 %v1674, %v1693
        %v1695 = vadd.f32 %v1694, 1.0
        %v1696 = vrcp.pop %v1695
        %v1697 = vmul.f32 %v1695, %v1696
        %v1698 = vsub.f32 1.0, %v1697
        %v1699 = vmul.f32 %v1696, %v1698
        %v1700 = vadd.f32 %v1696, %v1699
        %vm1701 = vweird.f32 %v1695
        %vm1702 = vweird.f32 %v1696
        %vm1703 = vmor %vm1701, %vm1702
        %v1704 = vsel %vm1703, %v1696, %v1700
        %v1705 = vand.u32 2147483647, %v1695
        %vm1706 = vcmp.eq.f32.partialorder %v1705, 8.507059e+37
        %v1707 = vand.u32 %v1695, 2147483648
        %v1708 = vor.u32 1.1754944e-38, %v1707
        %v1709 = vsel %vm1706, %v1708, %v1704
        %v1710 = vmul.f32 %v1685, %v1709
        %v1711 = vmin.f32 %v1710, 1.0
        %v1712 = vmax.f32 %v1711, -1.0
        %v1713 = vmul.f32 %v737, %v737
        %v1714 = vmin.f32 16.0, %v1713
        %v1715 = vmul.f32 %v1714, 2.1237322e-06
        %v1716 = vadd.f32 %v1715, 0.00028619796
        %v1717 = vmul.f32 %v1714, %v1716
        %v1718 = vadd.f32 %v1717, 0.0036580483
        %v1719 = vmul.f32 %v1714, %v1718
        %v1720 = vadd.f32 %v1719, 0.05243302
        %v1721 = vmul.f32 %v1714, %v1720
        %v1722 = vadd.f32 %v1721, 0.18741608
        %v1723 = vmul.f32 %v1714, %v1722
        %v1724 = vadd.f32 %v1723, 1.1283791
        %v1725 = vmul.f32 %v737, %v1724
        %v1726 = vmul.f32 %v1714, 3.8918573e-05
        %v1727 = vadd.f32 %v1726, 0.001143296
        %v1728 = vmul.f32 %v1714, %v1727
        %v1729 = vadd.f32 %v1728, 0.014752088
        %v1730 = vmul.f32 %v1714, %v1729
        %v1731 = vadd.f32 %v1730, 0.112945676
        %v1732 = vmul.f32 %v1714, %v1731
        %v1733 = vadd.f32 %v1732, 0.4994258
        %v1734 = vmul.f32 %v1714, %v1733
        %v1735 = vadd.f32 %v1734, 1.0
        %v1736 = vrcp.pop %v1735
        %v1737 = vmul.f32 %v1735, %v1736
        %v1738 = vsub.f32 1.0, %v1737
        %v1739 = vmul.f32 %v1736, %v1738
        %v1740 = vadd.f32 %v1736, %v1739
        %vm1741 = vweird.f32 %v1735
        %vm1742 = vweird.f32 %v1736
        %vm1743 = vmor %vm1741, %vm1742
        %v1744 = vsel %vm1743, %v1736, %v1740
        %v1745 = vand.u32 2147483647, %v1735
        %vm1746 = vcmp.eq.f32.partialorder %v1745, 8.507059e+37
        %v1747 = vand.u32 %v1735, 2147483648
        %v1748 = vor.u32 1.1754944e-38, %v1747
        %v1749 = vsel %vm1746, %v1748, %v1744
        %v1750 = vmul.f32 %v1725, %v1749
        %v1751 = vmin.f32 %v1750, 1.0
        %v1752 = vmax.f32 %v1751, -1.0
        %v1753 = vmul.f32 %v738, %v738
        %v1754 = vmin.f32 16.0, %v1753
        %v1755 = vmul.f32 %v1754, 2.1237322e-06
        %v1756 = vadd.f32 %v1755, 0.00028619796
        %v1757 = vmul.f32 %v1754, %v1756
        %v1758 = vadd.f32 %v1757, 0.0036580483
        %v1759 = vmul.f32 %v1754, %v1758
        %v1760 = vadd.f32 %v1759, 0.05243302
        %v1761 = vmul.f32 %v1754, %v1760
        %v1762 = vadd.f32 %v1761, 0.18741608
        %v1763 = vmul.f32 %v1754, %v1762
        %v1764 = vadd.f32 %v1763, 1.1283791
        %v1765 = vmul.f32 %v738, %v1764
        %v1766 = vmul.f32 %v1754, 3.8918573e-05
        %v1767 = vadd.f32 %v1766, 0.001143296
        %v1768 = vmul.f32 %v1754, %v1767
        %v1769 = vadd.f32 %v1768, 0.014752088
        %v1770 = vmul.f32 %v1754, %v1769
        %v1771 = vadd.f32 %v1770, 0.112945676
        %v1772 = vmul.f32 %v1754, %v1771
        %v1773 = vadd.f32 %v1772, 0.4994258
        %v1774 = vmul.f32 %v1754, %v1773
        %v1775 = vadd.f32 %v1774, 1.0
        %v1776 = vrcp.pop %v1775
        %v1777 = vmul.f32 %v1775, %v1776
        %v1778 = vsub.f32 1.0, %v1777
        %v1779 = vmul.f32 %v1776, %v1778
        %v1780 = vadd.f32 %v1776, %v1779
        %vm1781 = vweird.f32 %v1775
        %vm1782 = vweird.f32 %v1776
        %vm1783 = vmor %vm1781, %vm1782
        %v1784 = vsel %vm1783, %v1776, %v1780
        %v1785 = vand.u32 2147483647, %v1775
        %vm1786 = vcmp.eq.f32.partialorder %v1785, 8.507059e+37
        %v1787 = vand.u32 %v1775, 2147483648
        %v1788 = vor.u32 1.1754944e-38, %v1787
        %v1789 = vsel %vm1786, %v1788, %v1784
        %v1790 = vmul.f32 %v1765, %v1789
        %v1791 = vmin.f32 %v1790, 1.0
        %v1792 = vmax.f32 %v1791, -1.0
        %v1793 = vmul.f32 %v739, %v739
        %v1794 = vmin.f32 16.0, %v1793
        %v1795 = vmul.f32 %v1794, 2.1237322e-06
        %v1796 = vadd.f32 %v1795, 0.00028619796
        %v1797 = vmul.f32 %v1794, %v1796
        %v1798 = vadd.f32 %v1797, 0.0036580483
        %v1799 = vmul.f32 %v1794, %v1798
        %v1800 = vadd.f32 %v1799, 0.05243302
        %v1801 = vmul.f32 %v1794, %v1800
        %v1802 = vadd.f32 %v1801, 0.18741608
        %v1803 = vmul.f32 %v1794, %v1802
        %v1804 = vadd.f32 %v1803, 1.1283791
        %v1805 = vmul.f32 %v739, %v1804
        %v1806 = vmul.f32 %v1794, 3.8918573e-05
        %v1807 = vadd.f32 %v1806, 0.001143296
        %v1808 = vmul.f32 %v1794, %v1807
        %v1809 = vadd.f32 %v1808, 0.014752088
        %v1810 = vmul.f32 %v1794, %v1809
        %v1811 = vadd.f32 %v1810, 0.112945676
        %v1812 = vmul.f32 %v1794, %v1811
        %v1813 = vadd.f32 %v1812, 0.4994258
        %v1814 = vmul.f32 %v1794, %v1813
        %v1815 = vadd.f32 %v1814, 1.0
        %v1816 = vrcp.pop %v1815
        %v1817 = vmul.f32 %v1815, %v1816
        %v1818 = vsub.f32 1.0, %v1817
        %v1819 = vmul.f32 %v1816, %v1818
        %v1820 = vadd.f32 %v1816, %v1819
        %vm1821 = vweird.f32 %v1815
        %vm1822 = vweird.f32 %v1816
        %vm1823 = vmor %vm1821, %vm1822
        %v1824 = vsel %vm1823, %v1816, %v1820
        %v1825 = vand.u32 2147483647, %v1815
        %vm1826 = vcmp.eq.f32.partialorder %v1825, 8.507059e+37
        %v1827 = vand.u32 %v1815, 2147483648
        %v1828 = vor.u32 1.1754944e-38, %v1827
        %v1829 = vsel %vm1826, %v1828, %v1824
        %v1830 = vmul.f32 %v1805, %v1829
        %v1831 = vmin.f32 %v1830, 1.0
        %v1832 = vmax.f32 %v1831, -1.0
        %v1833 = vmul.f32 %v740, %v740
        %v1834 = vmin.f32 16.0, %v1833
        %v1835 = vmul.f32 %v1834, 2.1237322e-06
        %v1836 = vadd.f32 %v1835, 0.00028619796
        %v1837 = vmul.f32 %v1834, %v1836
        %v1838 = vadd.f32 %v1837, 0.0036580483
        %v1839 = vmul.f32 %v1834, %v1838
        %v1840 = vadd.f32 %v1839, 0.05243302
        %v1841 = vmul.f32 %v1834, %v1840
        %v1842 = vadd.f32 %v1841, 0.18741608
        %v1843 = vmul.f32 %v1834, %v1842
        %v1844 = vadd.f32 %v1843, 1.1283791
        %v1845 = vmul.f32 %v740, %v1844
        %v1846 = vmul.f32 %v1834, 3.8918573e-05
        %v1847 = vadd.f32 %v1846, 0.001143296
        %v1848 = vmul.f32 %v1834, %v1847
        %v1849 = vadd.f32 %v1848, 0.014752088
        %v1850 = vmul.f32 %v1834, %v1849
        %v1851 = vadd.f32 %v1850, 0.112945676
        %v1852 = vmul.f32 %v1834, %v1851
        %v1853 = vadd.f32 %v1852, 0.4994258
        %v1854 = vmul.f32 %v1834, %v1853
        %v1855 = vadd.f32 %v1854, 1.0
        %v1856 = vrcp.pop %v1855
        %v1857 = vmul.f32 %v1855, %v1856
        %v1858 = vsub.f32 1.0, %v1857
        %v1859 = vmul.f32 %v1856, %v1858
        %v1860 = vadd.f32 %v1856, %v1859
        %vm1861 = vweird.f32 %v1855
        %vm1862 = vweird.f32 %v1856
        %vm1863 = vmor %vm1861, %vm1862
        %v1864 = vsel %vm1863, %v1856, %v1860
        %v1865 = vand.u32 2147483647, %v1855
        %vm1866 = vcmp.eq.f32.partialorder %v1865, 8.507059e+37
        %v1867 = vand.u32 %v1855, 2147483648
        %v1868 = vor.u32 1.1754944e-38, %v1867
        %v1869 = vsel %vm1866, %v1868, %v1864
        %v1870 = vmul.f32 %v1845, %v1869
        %v1871 = vmin.f32 %v1870, 1.0
        %v1872 = vmax.f32 %v1871, -1.0
        %v1873 = vmul.f32 %v741, %v741
        %v1874 = vmin.f32 16.0, %v1873
        %v1875 = vmul.f32 %v1874, 2.1237322e-06
        %v1876 = vadd.f32 %v1875, 0.00028619796
        %v1877 = vmul.f32 %v1874, %v1876
        %v1878 = vadd.f32 %v1877, 0.0036580483
        %v1879 = vmul.f32 %v1874, %v1878
        %v1880 = vadd.f32 %v1879, 0.05243302
        %v1881 = vmul.f32 %v1874, %v1880
        %v1882 = vadd.f32 %v1881, 0.18741608
        %v1883 = vmul.f32 %v1874, %v1882
        %v1884 = vadd.f32 %v1883, 1.1283791
        %v1885 = vmul.f32 %v741, %v1884
        %v1886 = vmul.f32 %v1874, 3.8918573e-05
        %v1887 = vadd.f32 %v1886, 0.001143296
        %v1888 = vmul.f32 %v1874, %v1887
        %v1889 = vadd.f32 %v1888, 0.014752088
        %v1890 = vmul.f32 %v1874, %v1889
        %v1891 = vadd.f32 %v1890, 0.112945676
        %v1892 = vmul.f32 %v1874, %v1891
        %v1893 = vadd.f32 %v1892, 0.4994258
        %v1894 = vmul.f32 %v1874, %v1893
        %v1895 = vadd.f32 %v1894, 1.0
        %v1896 = vrcp.pop %v1895
        %v1897 = vmul.f32 %v1895, %v1896
        %v1898 = vsub.f32 1.0, %v1897
        %v1899 = vmul.f32 %v1896, %v1898
        %v1900 = vadd.f32 %v1896, %v1899
        %vm1901 = vweird.f32 %v1895
        %vm1902 = vweird.f32 %v1896
        %vm1903 = vmor %vm1901, %vm1902
        %v1904 = vsel %vm1903, %v1896, %v1900
        %v1905 = vand.u32 2147483647, %v1895
        %vm1906 = vcmp.eq.f32.partialorder %v1905, 8.507059e+37
        %v1907 = vand.u32 %v1895, 2147483648
        %v1908 = vor.u32 1.1754944e-38, %v1907
        %v1909 = vsel %vm1906, %v1908, %v1904
        %v1910 = vmul.f32 %v1885, %v1909
        %v1911 = vmin.f32 %v1910, 1.0
        %v1912 = vmax.f32 %v1911, -1.0
        %v1913 = vmul.f32 %v742, %v742
        %v1914 = vmin.f32 16.0, %v1913
        %v1915 = vmul.f32 %v1914, 2.1237322e-06
        %v1916 = vadd.f32 %v1915, 0.00028619796
        %v1917 = vmul.f32 %v1914, %v1916
        %v1918 = vadd.f32 %v1917, 0.0036580483
        %v1919 = vmul.f32 %v1914, %v1918
        %v1920 = vadd.f32 %v1919, 0.05243302
        %v1921 = vmul.f32 %v1914, %v1920
        %v1922 = vadd.f32 %v1921, 0.18741608
        %v1923 = vmul.f32 %v1914, %v1922
        %v1924 = vadd.f32 %v1923, 1.1283791
        %v1925 = vmul.f32 %v742, %v1924
        %v1926 = vmul.f32 %v1914, 3.8918573e-05
        %v1927 = vadd.f32 %v1926, 0.001143296
        %v1928 = vmul.f32 %v1914, %v1927
        %v1929 = vadd.f32 %v1928, 0.014752088
        %v1930 = vmul.f32 %v1914, %v1929
        %v1931 = vadd.f32 %v1930, 0.112945676
        %v1932 = vmul.f32 %v1914, %v1931
        %v1933 = vadd.f32 %v1932, 0.4994258
        %v1934 = vmul.f32 %v1914, %v1933
        %v1935 = vadd.f32 %v1934, 1.0
        %v1936 = vrcp.pop %v1935
        %v1937 = vmul.f32 %v1935, %v1936
        %v1938 = vsub.f32 1.0, %v1937
        %v1939 = vmul.f32 %v1936, %v1938
        %v1940 = vadd.f32 %v1936, %v1939
        %vm1941 = vweird.f32 %v1935
        %vm1942 = vweird.f32 %v1936
        %vm1943 = vmor %vm1941, %vm1942
        %v1944 = vsel %vm1943, %v1936, %v1940
        %v1945 = vand.u32 2147483647, %v1935
        %vm1946 = vcmp.eq.f32.partialorder %v1945, 8.507059e+37
        %v1947 = vand.u32 %v1935, 2147483648
        %v1948 = vor.u32 1.1754944e-38, %v1947
        %v1949 = vsel %vm1946, %v1948, %v1944
        %v1950 = vmul.f32 %v1925, %v1949
        %v1951 = vmin.f32 %v1950, 1.0
        %v1952 = vmax.f32 %v1951, -1.0
        %v1953 = vmul.f32 %v743, %v743
        %v1954 = vmin.f32 16.0, %v1953
        %v1955 = vmul.f32 %v1954, 2.1237322e-06
        %v1956 = vadd.f32 %v1955, 0.00028619796
        %v1957 = vmul.f32 %v1954, %v1956
        %v1958 = vadd.f32 %v1957, 0.0036580483
        %v1959 = vmul.f32 %v1954, %v1958
        %v1960 = vadd.f32 %v1959, 0.05243302
        %v1961 = vmul.f32 %v1954, %v1960
        %v1962 = vadd.f32 %v1961, 0.18741608
        %v1963 = vmul.f32 %v1954, %v1962
        %v1964 = vadd.f32 %v1963, 1.1283791
        %v1965 = vmul.f32 %v743, %v1964
        %v1966 = vmul.f32 %v1954, 3.8918573e-05
        %v1967 = vadd.f32 %v1966, 0.001143296
        %v1968 = vmul.f32 %v1954, %v1967
        %v1969 = vadd.f32 %v1968, 0.014752088
        %v1970 = vmul.f32 %v1954, %v1969
        %v1971 = vadd.f32 %v1970, 0.112945676
        %v1972 = vmul.f32 %v1954, %v1971
        %v1973 = vadd.f32 %v1972, 0.4994258
        %v1974 = vmul.f32 %v1954, %v1973
        %v1975 = vadd.f32 %v1974, 1.0
        %v1976 = vrcp.pop %v1975
        %v1977 = vmul.f32 %v1975, %v1976
        %v1978 = vsub.f32 1.0, %v1977
        %v1979 = vmul.f32 %v1976, %v1978
        %v1980 = vadd.f32 %v1976, %v1979
        %vm1981 = vweird.f32 %v1975
        %vm1982 = vweird.f32 %v1976
        %vm1983 = vmor %vm1981, %vm1982
        %v1984 = vsel %vm1983, %v1976, %v1980
        %v1985 = vand.u32 2147483647, %v1975
        %vm1986 = vcmp.eq.f32.partialorder %v1985, 8.507059e+37
        %v1987 = vand.u32 %v1975, 2147483648
        %v1988 = vor.u32 1.1754944e-38, %v1987
        %v1989 = vsel %vm1986, %v1988, %v1984
        %v1990 = vmul.f32 %v1965, %v1989
        %v1991 = vmin.f32 %v1990, 1.0
        %v1992 = vmax.f32 %v1991, -1.0
        %v1993 = vmul.f32 %v744, %v744
        %v1994 = vmin.f32 16.0, %v1993
        %v1995 = vmul.f32 %v1994, 2.1237322e-06
        %v1996 = vadd.f32 %v1995, 0.00028619796
        %v1997 = vmul.f32 %v1994, %v1996
        %v1998 = vadd.f32 %v1997, 0.0036580483
        %v1999 = vmul.f32 %v1994, %v1998
        %v2000 = vadd.f32 %v1999, 0.05243302
        %v2001 = vmul.f32 %v1994, %v2000
        %v2002 = vadd.f32 %v2001, 0.18741608
        %v2003 = vmul.f32 %v1994, %v2002
        %v2004 = vadd.f32 %v2003, 1.1283791
        %v2005 = vmul.f32 %v744, %v2004
        %v2006 = vmul.f32 %v1994, 3.8918573e-05
        %v2007 = vadd.f32 %v2006, 0.001143296
        %v2008 = vmul.f32 %v1994, %v2007
        %v2009 = vadd.f32 %v2008, 0.014752088
        %v2010 = vmul.f32 %v1994, %v2009
        %v2011 = vadd.f32 %v2010, 0.112945676
        %v2012 = vmul.f32 %v1994, %v2011
        %v2013 = vadd.f32 %v2012, 0.4994258
        %v2014 = vmul.f32 %v1994, %v2013
        %v2015 = vadd.f32 %v2014, 1.0
        %v2016 = vrcp.pop %v2015
        %v2017 = vmul.f32 %v2015, %v2016
        %v2018 = vsub.f32 1.0, %v2017
        %v2019 = vmul.f32 %v2016, %v2018
        %v2020 = vadd.f32 %v2016, %v2019
        %vm2021 = vweird.f32 %v2015
        %vm2022 = vweird.f32 %v2016
        %vm2023 = vmor %vm2021, %vm2022
        %v2024 = vsel %vm2023, %v2016, %v2020
        %v2025 = vand.u32 2147483647, %v2015
        %vm2026 = vcmp.eq.f32.partialorder %v2025, 8.507059e+37
        %v2027 = vand.u32 %v2015, 2147483648
        %v2028 = vor.u32 1.1754944e-38, %v2027
        %v2029 = vsel %vm2026, %v2028, %v2024
        %v2030 = vmul.f32 %v2005, %v2029
        %v2031 = vmin.f32 %v2030, 1.0
        %v2032 = vmax.f32 %v2031, -1.0
        %v2033 = vmul.f32 %v745, %v745
        %v2034 = vmin.f32 16.0, %v2033
        %v2035 = vmul.f32 %v2034, 2.1237322e-06
        %v2036 = vadd.f32 %v2035, 0.00028619796
        %v2037 = vmul.f32 %v2034, %v2036
        %v2038 = vadd.f32 %v2037, 0.0036580483
        %v2039 = vmul.f32 %v2034, %v2038
        %v2040 = vadd.f32 %v2039, 0.05243302
        %v2041 = vmul.f32 %v2034, %v2040
        %v2042 = vadd.f32 %v2041, 0.18741608
        %v2043 = vmul.f32 %v2034, %v2042
        %v2044 = vadd.f32 %v2043, 1.1283791
        %v2045 = vmul.f32 %v745, %v2044
        %v2046 = vmul.f32 %v2034, 3.8918573e-05
        %v2047 = vadd.f32 %v2046, 0.001143296
        %v2048 = vmul.f32 %v2034, %v2047
        %v2049 = vadd.f32 %v2048, 0.014752088
        %v2050 = vmul.f32 %v2034, %v2049
        %v2051 = vadd.f32 %v2050, 0.112945676
        %v2052 = vmul.f32 %v2034, %v2051
        %v2053 = vadd.f32 %v2052, 0.4994258
        %v2054 = vmul.f32 %v2034, %v2053
        %v2055 = vadd.f32 %v2054, 1.0
        %v2056 = vrcp.pop %v2055
        %v2057 = vmul.f32 %v2055, %v2056
        %v2058 = vsub.f32 1.0, %v2057
        %v2059 = vmul.f32 %v2056, %v2058
        %v2060 = vadd.f32 %v2056, %v2059
        %vm2061 = vweird.f32 %v2055
        %vm2062 = vweird.f32 %v2056
        %vm2063 = vmor %vm2061, %vm2062
        %v2064 = vsel %vm2063, %v2056, %v2060
        %v2065 = vand.u32 2147483647, %v2055
        %vm2066 = vcmp.eq.f32.partialorder %v2065, 8.507059e+37
        %v2067 = vand.u32 %v2055, 2147483648
        %v2068 = vor.u32 1.1754944e-38, %v2067
        %v2069 = vsel %vm2066, %v2068, %v2064
        %v2070 = vmul.f32 %v2045, %v2069
        %v2071 = vmin.f32 %v2070, 1.0
        %v2072 = vmax.f32 %v2071, -1.0
        %v2073 = vmul.f32 %v746, %v746
        %v2074 = vmin.f32 16.0, %v2073
        %v2075 = vmul.f32 %v2074, 2.1237322e-06
        %v2076 = vadd.f32 %v2075, 0.00028619796
        %v2077 = vmul.f32 %v2074, %v2076
        %v2078 = vadd.f32 %v2077, 0.0036580483
        %v2079 = vmul.f32 %v2074, %v2078
        %v2080 = vadd.f32 %v2079, 0.05243302
        %v2081 = vmul.f32 %v2074, %v2080
        %v2082 = vadd.f32 %v2081, 0.18741608
        %v2083 = vmul.f32 %v2074, %v2082
        %v2084 = vadd.f32 %v2083, 1.1283791
        %v2085 = vmul.f32 %v746, %v2084
        %v2086 = vmul.f32 %v2074, 3.8918573e-05
        %v2087 = vadd.f32 %v2086, 0.001143296
        %v2088 = vmul.f32 %v2074, %v2087
        %v2089 = vadd.f32 %v2088, 0.014752088
        %v2090 = vmul.f32 %v2074, %v2089
        %v2091 = vadd.f32 %v2090, 0.112945676
        %v2092 = vmul.f32 %v2074, %v2091
        %v2093 = vadd.f32 %v2092, 0.4994258
        %v2094 = vmul.f32 %v2074, %v2093
        %v2095 = vadd.f32 %v2094, 1.0
        %v2096 = vrcp.pop %v2095
        %v2097 = vmul.f32 %v2095, %v2096
        %v2098 = vsub.f32 1.0, %v2097
        %v2099 = vmul.f32 %v2096, %v2098
        %v2100 = vadd.f32 %v2096, %v2099
        %vm2101 = vweird.f32 %v2095
        %vm2102 = vweird.f32 %v2096
        %vm2103 = vmor %vm2101, %vm2102
        %v2104 = vsel %vm2103, %v2096, %v2100
        %v2105 = vand.u32 2147483647, %v2095
        %vm2106 = vcmp.eq.f32.partialorder %v2105, 8.507059e+37
        %v2107 = vand.u32 %v2095, 2147483648
        %v2108 = vor.u32 1.1754944e-38, %v2107
        %v2109 = vsel %vm2106, %v2108, %v2104
        %v2110 = vmul.f32 %v2085, %v2109
        %v2111 = vmin.f32 %v2110, 1.0
        %v2112 = vmax.f32 %v2111, -1.0
        %v2113 = vmul.f32 %v747, %v747
        %v2114 = vmin.f32 16.0, %v2113
        %v2115 = vmul.f32 %v2114, 2.1237322e-06
        %v2116 = vadd.f32 %v2115, 0.00028619796
        %v2117 = vmul.f32 %v2114, %v2116
        %v2118 = vadd.f32 %v2117, 0.0036580483
        %v2119 = vmul.f32 %v2114, %v2118
        %v2120 = vadd.f32 %v2119, 0.05243302
        %v2121 = vmul.f32 %v2114, %v2120
        %v2122 = vadd.f32 %v2121, 0.18741608
        %v2123 = vmul.f32 %v2114, %v2122
        %v2124 = vadd.f32 %v2123, 1.1283791
        %v2125 = vmul.f32 %v747, %v2124
        %v2126 = vmul.f32 %v2114, 3.8918573e-05
        %v2127 = vadd.f32 %v2126, 0.001143296
        %v2128 = vmul.f32 %v2114, %v2127
        %v2129 = vadd.f32 %v2128, 0.014752088
        %v2130 = vmul.f32 %v2114, %v2129
        %v2131 = vadd.f32 %v2130, 0.112945676
        %v2132 = vmul.f32 %v2114, %v2131
        %v2133 = vadd.f32 %v2132, 0.4994258
        %v2134 = vmul.f32 %v2114, %v2133
        %v2135 = vadd.f32 %v2134, 1.0
        %v2136 = vrcp.pop %v2135
        %v2137 = vmul.f32 %v2135, %v2136
        %v2138 = vsub.f32 1.0, %v2137
        %v2139 = vmul.f32 %v2136, %v2138
        %v2140 = vadd.f32 %v2136, %v2139
        %vm2141 = vweird.f32 %v2135
        %vm2142 = vweird.f32 %v2136
        %vm2143 = vmor %vm2141, %vm2142
        %v2144 = vsel %vm2143, %v2136, %v2140
        %v2145 = vand.u32 2147483647, %v2135
        %vm2146 = vcmp.eq.f32.partialorder %v2145, 8.507059e+37
        %v2147 = vand.u32 %v2135, 2147483648
        %v2148 = vor.u32 1.1754944e-38, %v2147
        %v2149 = vsel %vm2146, %v2148, %v2144
        %v2150 = vmul.f32 %v2125, %v2149
        %v2151 = vmin.f32 %v2150, 1.0
        %v2152 = vmax.f32 %v2151, -1.0
        %v2153 = vmul.f32 %v748, %v748
        %v2154 = vmin.f32 16.0, %v2153
        %v2155 = vmul.f32 %v2154, 2.1237322e-06
        %v2156 = vadd.f32 %v2155, 0.00028619796
        %v2157 = vmul.f32 %v2154, %v2156
        %v2158 = vadd.f32 %v2157, 0.0036580483
        %v2159 = vmul.f32 %v2154, %v2158
        %v2160 = vadd.f32 %v2159, 0.05243302
        %v2161 = vmul.f32 %v2154, %v2160
        %v2162 = vadd.f32 %v2161, 0.18741608
        %v2163 = vmul.f32 %v2154, %v2162
        %v2164 = vadd.f32 %v2163, 1.1283791
        %v2165 = vmul.f32 %v748, %v2164
        %v2166 = vmul.f32 %v2154, 3.8918573e-05
        %v2167 = vadd.f32 %v2166, 0.001143296
        %v2168 = vmul.f32 %v2154, %v2167
        %v2169 = vadd.f32 %v2168, 0.014752088
        %v2170 = vmul.f32 %v2154, %v2169
        %v2171 = vadd.f32 %v2170, 0.112945676
        %v2172 = vmul.f32 %v2154, %v2171
        %v2173 = vadd.f32 %v2172, 0.4994258
        %v2174 = vmul.f32 %v2154, %v2173
        %v2175 = vadd.f32 %v2174, 1.0
        %v2176 = vrcp.pop %v2175
        %v2177 = vmul.f32 %v2175, %v2176
        %v2178 = vsub.f32 1.0, %v2177
        %v2179 = vmul.f32 %v2176, %v2178
        %v2180 = vadd.f32 %v2176, %v2179
        %vm2181 = vweird.f32 %v2175
        %vm2182 = vweird.f32 %v2176
        %vm2183 = vmor %vm2181, %vm2182
        %v2184 = vsel %vm2183, %v2176, %v2180
        %v2185 = vand.u32 2147483647, %v2175
        %vm2186 = vcmp.eq.f32.partialorder %v2185, 8.507059e+37
        %v2187 = vand.u32 %v2175, 2147483648
        %v2188 = vor.u32 1.1754944e-38, %v2187
        %v2189 = vsel %vm2186, %v2188, %v2184
        %v2190 = vmul.f32 %v2165, %v2189
        %v2191 = vmin.f32 %v2190, 1.0
        %v2192 = vmax.f32 %v2191, -1.0
        %v2193 = vmul.f32 %v749, %v749
        %v2194 = vmin.f32 16.0, %v2193
        %v2195 = vmul.f32 %v2194, 2.1237322e-06
        %v2196 = vadd.f32 %v2195, 0.00028619796
        %v2197 = vmul.f32 %v2194, %v2196
        %v2198 = vadd.f32 %v2197, 0.0036580483
        %v2199 = vmul.f32 %v2194, %v2198
        %v2200 = vadd.f32 %v2199, 0.05243302
        %v2201 = vmul.f32 %v2194, %v2200
        %v2202 = vadd.f32 %v2201, 0.18741608
        %v2203 = vmul.f32 %v2194, %v2202
        %v2204 = vadd.f32 %v2203, 1.1283791
        %v2205 = vmul.f32 %v749, %v2204
        %v2206 = vmul.f32 %v2194, 3.8918573e-05
        %v2207 = vadd.f32 %v2206, 0.001143296
        %v2208 = vmul.f32 %v2194, %v2207
        %v2209 = vadd.f32 %v2208, 0.014752088
        %v2210 = vmul.f32 %v2194, %v2209
        %v2211 = vadd.f32 %v2210, 0.112945676
        %v2212 = vmul.f32 %v2194, %v2211
        %v2213 = vadd.f32 %v2212, 0.4994258
        %v2214 = vmul.f32 %v2194, %v2213
        %v2215 = vadd.f32 %v2214, 1.0
        %v2216 = vrcp.pop %v2215
        %v2217 = vmul.f32 %v2215, %v2216
        %v2218 = vsub.f32 1.0, %v2217
        %v2219 = vmul.f32 %v2216, %v2218
        %v2220 = vadd.f32 %v2216, %v2219
        %vm2221 = vweird.f32 %v2215
        %vm2222 = vweird.f32 %v2216
        %vm2223 = vmor %vm2221, %vm2222
        %v2224 = vsel %vm2223, %v2216, %v2220
        %v2225 = vand.u32 2147483647, %v2215
        %vm2226 = vcmp.eq.f32.partialorder %v2225, 8.507059e+37
        %v2227 = vand.u32 %v2215, 2147483648
        %v2228 = vor.u32 1.1754944e-38, %v2227
        %v2229 = vsel %vm2226, %v2228, %v2224
        %v2230 = vmul.f32 %v2205, %v2229
        %v2231 = vmin.f32 %v2230, 1.0
        %v2232 = vmax.f32 %v2231, -1.0
        %v2233 = vmul.f32 %v750, %v750
        %v2234 = vmin.f32 16.0, %v2233
        %v2235 = vmul.f32 %v2234, 2.1237322e-06
        %v2236 = vadd.f32 %v2235, 0.00028619796
        %v2237 = vmul.f32 %v2234, %v2236
        %v2238 = vadd.f32 %v2237, 0.0036580483
        %v2239 = vmul.f32 %v2234, %v2238
        %v2240 = vadd.f32 %v2239, 0.05243302
        %v2241 = vmul.f32 %v2234, %v2240
        %v2242 = vadd.f32 %v2241, 0.18741608
        %v2243 = vmul.f32 %v2234, %v2242
        %v2244 = vadd.f32 %v2243, 1.1283791
        %v2245 = vmul.f32 %v750, %v2244
        %v2246 = vmul.f32 %v2234, 3.8918573e-05
        %v2247 = vadd.f32 %v2246, 0.001143296
        %v2248 = vmul.f32 %v2234, %v2247
        %v2249 = vadd.f32 %v2248, 0.014752088
        %v2250 = vmul.f32 %v2234, %v2249
        %v2251 = vadd.f32 %v2250, 0.112945676
        %v2252 = vmul.f32 %v2234, %v2251
        %v2253 = vadd.f32 %v2252, 0.4994258
        %v2254 = vmul.f32 %v2234, %v2253
        %v2255 = vadd.f32 %v2254, 1.0
        %v2256 = vrcp.pop %v2255
        %v2257 = vmul.f32 %v2255, %v2256
        %v2258 = vsub.f32 1.0, %v2257
        %v2259 = vmul.f32 %v2256, %v2258
        %v2260 = vadd.f32 %v2256, %v2259
        %vm2261 = vweird.f32 %v2255
        %vm2262 = vweird.f32 %v2256
        %vm2263 = vmor %vm2261, %vm2262
        %v2264 = vsel %vm2263, %v2256, %v2260
        %v2265 = vand.u32 2147483647, %v2255
        %vm2266 = vcmp.eq.f32.partialorder %v2265, 8.507059e+37
        %v2267 = vand.u32 %v2255, 2147483648
        %v2268 = vor.u32 1.1754944e-38, %v2267
        %v2269 = vsel %vm2266, %v2268, %v2264
        %v2270 = vmul.f32 %v2245, %v2269
        %v2271 = vmin.f32 %v2270, 1.0
        %v2272 = vmax.f32 %v2271, -1.0
        %v2273 = vmul.f32 %v751, %v751
        %v2274 = vmin.f32 16.0, %v2273
        %v2275 = vmul.f32 %v2274, 2.1237322e-06
        %v2276 = vadd.f32 %v2275, 0.00028619796
        %v2277 = vmul.f32 %v2274, %v2276
        %v2278 = vadd.f32 %v2277, 0.0036580483
        %v2279 = vmul.f32 %v2274, %v2278
        %v2280 = vadd.f32 %v2279, 0.05243302
        %v2281 = vmul.f32 %v2274, %v2280
        %v2282 = vadd.f32 %v2281, 0.18741608
        %v2283 = vmul.f32 %v2274, %v2282
        %v2284 = vadd.f32 %v2283, 1.1283791
        %v2285 = vmul.f32 %v751, %v2284
        %v2286 = vmul.f32 %v2274, 3.8918573e-05
        %v2287 = vadd.f32 %v2286, 0.001143296
        %v2288 = vmul.f32 %v2274, %v2287
        %v2289 = vadd.f32 %v2288, 0.014752088
        %v2290 = vmul.f32 %v2274, %v2289
        %v2291 = vadd.f32 %v2290, 0.112945676
        %v2292 = vmul.f32 %v2274, %v2291
        %v2293 = vadd.f32 %v2292, 0.4994258
        %v2294 = vmul.f32 %v2274, %v2293
        %v2295 = vadd.f32 %v2294, 1.0
        %v2296 = vrcp.pop %v2295
        %v2297 = vmul.f32 %v2295, %v2296
        %v2298 = vsub.f32 1.0, %v2297
        %v2299 = vmul.f32 %v2296, %v2298
        %v2300 = vadd.f32 %v2296, %v2299
        %vm2301 = vweird.f32 %v2295
        %vm2302 = vweird.f32 %v2296
        %vm2303 = vmor %vm2301, %vm2302
        %v2304 = vsel %vm2303, %v2296, %v2300
        %v2305 = vand.u32 2147483647, %v2295
        %vm2306 = vcmp.eq.f32.partialorder %v2305, 8.507059e+37
        %v2307 = vand.u32 %v2295, 2147483648
        %v2308 = vor.u32 1.1754944e-38, %v2307
        %v2309 = vsel %vm2306, %v2308, %v2304
        %v2310 = vmul.f32 %v2285, %v2309
        %v2311 = vmin.f32 %v2310, 1.0
        %v2312 = vmax.f32 %v2311, -1.0
        %v2313 = vmul.f32 %v752, %v752
        %v2314 = vmin.f32 16.0, %v2313
        %v2315 = vmul.f32 %v2314, 2.1237322e-06
        %v2316 = vadd.f32 %v2315, 0.00028619796
        %v2317 = vmul.f32 %v2314, %v2316
        %v2318 = vadd.f32 %v2317, 0.0036580483
        %v2319 = vmul.f32 %v2314, %v2318
        %v2320 = vadd.f32 %v2319, 0.05243302
        %v2321 = vmul.f32 %v2314, %v2320
        %v2322 = vadd.f32 %v2321, 0.18741608
        %v2323 = vmul.f32 %v2314, %v2322
        %v2324 = vadd.f32 %v2323, 1.1283791
        %v2325 = vmul.f32 %v752, %v2324
        %v2326 = vmul.f32 %v2314, 3.8918573e-05
        %v2327 = vadd.f32 %v2326, 0.001143296
        %v2328 = vmul.f32 %v2314, %v2327
        %v2329 = vadd.f32 %v2328, 0.014752088
        %v2330 = vmul.f32 %v2314, %v2329
        %v2331 = vadd.f32 %v2330, 0.112945676
        %v2332 = vmul.f32 %v2314, %v2331
        %v2333 = vadd.f32 %v2332, 0.4994258
        %v2334 = vmul.f32 %v2314, %v2333
        %v2335 = vadd.f32 %v2334, 1.0
        %v2336 = vrcp.pop %v2335
        %v2337 = vmul.f32 %v2335, %v2336
        %v2338 = vsub.f32 1.0, %v2337
        %v2339 = vmul.f32 %v2336, %v2338
        %v2340 = vadd.f32 %v2336, %v2339
        %vm2341 = vweird.f32 %v2335
        %vm2342 = vweird.f32 %v2336
        %vm2343 = vmor %vm2341, %vm2342
        %v2344 = vsel %vm2343, %v2336, %v2340
        %v2345 = vand.u32 2147483647, %v2335
        %vm2346 = vcmp.eq.f32.partialorder %v2345, 8.507059e+37
        %v2347 = vand.u32 %v2335, 2147483648
        %v2348 = vor.u32 1.1754944e-38, %v2347
        %v2349 = vsel %vm2346, %v2348, %v2344
        %v2350 = vmul.f32 %v2325, %v2349
        %v2351 = vmin.f32 %v2350, 1.0
        %v2352 = vmax.f32 %v2351, -1.0
        %v2353 = vadd.f32 %v792, 1.0
        %v2354 = vadd.f32 %v832, 1.0
        %v2355 = vadd.f32 %v872, 1.0
        %v2356 = vadd.f32 %v912, 1.0
        %v2357 = vadd.f32 %v952, 1.0
        %v2358 = vadd.f32 %v992, 1.0
        %v2359 = vadd.f32 %v1032, 1.0
        %v2360 = vadd.f32 %v1072, 1.0
        %v2361 = vadd.f32 %v1112, 1.0
        %v2362 = vadd.f32 %v1152, 1.0
        %v2363 = vadd.f32 %v1192, 1.0
        %v2364 = vadd.f32 %v1232, 1.0
        %v2365 = vadd.f32 %v1272, 1.0
        %v2366 = vadd.f32 %v1312, 1.0
        %v2367 = vadd.f32 %v1352, 1.0
        %v2368 = vadd.f32 %v1392, 1.0
        %v2369 = vadd.f32 %v1432, 1.0
        %v2370 = vadd.f32 %v1472, 1.0
        %v2371 = vadd.f32 %v1512, 1.0
        %v2372 = vadd.f32 %v1552, 1.0
        %v2373 = vadd.f32 %v1592, 1.0
        %v2374 = vadd.f32 %v1632, 1.0
        %v2375 = vadd.f32 %v1672, 1.0
        %v2376 = vadd.f32 %v1712, 1.0
        %v2377 = vadd.f32 %v1752, 1.0
        %v2378 = vadd.f32 %v1792, 1.0
        %v2379 = vadd.f32 %v1832, 1.0
        %v2380 = vadd.f32 %v1872, 1.0
        %v2381 = vadd.f32 %v1912, 1.0
        %v2382 = vadd.f32 %v1952, 1.0
        %v2383 = vadd.f32 %v1992, 1.0
        %v2384 = vadd.f32 %v2032, 1.0
        %v2385 = vadd.f32 %v2072, 1.0
        %v2386 = vadd.f32 %v2112, 1.0
        %v2387 = vadd.f32 %v2152, 1.0
        %v2388 = vadd.f32 %v2192, 1.0
        %v2389 = vadd.f32 %v2232, 1.0
        %v2390 = vadd.f32 %v2272, 1.0
        %v2391 = vadd.f32 %v2312, 1.0
        %v2392 = vadd.f32 %v2352, 1.0
        %v2393 = vmul.f32 %v673, %v2353
        %v2394 = vmul.f32 %v674, %v2354
        %v2395 = vmul.f32 %v675, %v2355
        %v2396 = vmul.f32 %v676, %v2356
        %v2397 = vmul.f32 %v677, %v2357
        %v2398 = vmul.f32 %v678, %v2358
        %v2399 = vmul.f32 %v679, %v2359
        %v2400 = vmul.f32 %v680, %v2360
        %v2401 = vmul.f32 %v681, %v2361
        %v2402 = vmul.f32 %v682, %v2362
        %v2403 = vmul.f32 %v683, %v2363
        %v2404 = vmul.f32 %v684, %v2364
        %v2405 = vmul.f32 %v685, %v2365
        %v2406 = vmul.f32 %v686, %v2366
        %v2407 = vmul.f32 %v687, %v2367
        %v2408 = vmul.f32 %v688, %v2368
        %v2409 = vmul.f32 %v689, %v2369
        %v2410 = vmul.f32 %v690, %v2370
        %v2411 = vmul.f32 %v691, %v2371
        %v2412 = vmul.f32 %v692, %v2372
        %v2413 = vmul.f32 %v693, %v2373
        %v2414 = vmul.f32 %v694, %v2374
        %v2415 = vmul.f32 %v695, %v2375
        %v2416 = vmul.f32 %v696, %v2376
        %v2417 = vmul.f32 %v697, %v2377
        %v2418 = vmul.f32 %v698, %v2378
        %v2419 = vmul.f32 %v699, %v2379
        %v2420 = vmul.f32 %v700, %v2380
        %v2421 = vmul.f32 %v701, %v2381
        %v2422 = vmul.f32 %v702, %v2382
        %v2423 = vmul.f32 %v703, %v2383
        %v2424 = vmul.f32 %v704, %v2384
        %v2425 = vmul.f32 %v705, %v2385
        %v2426 = vmul.f32 %v706, %v2386
        %v2427 = vmul.f32 %v707, %v2387
        %v2428 = vmul.f32 %v708, %v2388
        %v2429 = vmul.f32 %v709, %v2389
        %v2430 = vmul.f32 %v710, %v2390
        %v2431 = vmul.f32 %v711, %v2391
        %v2432 = vmul.f32 %v712, %v2392
        %v2433 = vpack.c.bf16 %v2397, %v2393
        %v2434 = vpack.c.bf16 %v2398, %v2394
        %v2435 = vpack.c.bf16 %v2399, %v2395
        %v2436 = vpack.c.bf16 %v2400, %v2396
        %v2437 = vpack.c.bf16 %v2405, %v2401
        %v2438 = vpack.c.bf16 %v2406, %v2402
        %v2439 = vpack.c.bf16 %v2407, %v2403
        %v2440 = vpack.c.bf16 %v2408, %v2404
        %v2441 = vpack.c.bf16 %v2413, %v2409
        %v2442 = vpack.c.bf16 %v2414, %v2410
        %v2443 = vpack.c.bf16 %v2415, %v2411
        %v2444 = vpack.c.bf16 %v2416, %v2412
        %v2445 = vpack.c.bf16 %v2421, %v2417
        %v2446 = vpack.c.bf16 %v2422, %v2418
        %v2447 = vpack.c.bf16 %v2423, %v2419
        %v2448 = vpack.c.bf16 %v2424, %v2420
        %v2449 = vpack.c.bf16 %v2429, %v2425
        %v2450 = vpack.c.bf16 %v2430, %v2426
        %v2451 = vpack.c.bf16 %v2431, %v2427
        %v2452 = vpack.c.bf16 %v2432, %v2428
        %v2453 = vld [vmem:[#allocation8] sm:$0xf]
        %v2454 = vld [vmem:[#allocation8 + $0x4] sm:$0xf]
        %v2455 = vld [vmem:[#allocation8 + $0x8] sm:$0xf]
        %v2456 = vld [vmem:[#allocation8 + $0xc] sm:$0xf]
        %v2457 = vld [vmem:[#allocation8 + $0x10] sm:$0xf]
        %v2458 = vld [vmem:[#allocation8 + $0x14] sm:$0xf]
        %v2459 = vld [vmem:[#allocation8 + $0x18] sm:$0xf]
        %v2460 = vld [vmem:[#allocation8 + $0x1c] sm:$0xf]
        %v2461 = vld [vmem:[#allocation8 + $0x20] sm:$0xf]
        %v2462 = vld [vmem:[#allocation8 + $0x24] sm:$0xf]
        %v2463 = vld [vmem:[#allocation8 + $0x28] sm:$0xf]
        %v2464 = vld [vmem:[#allocation8 + $0x2c] sm:$0xf]
        %v2465 = vld [vmem:[#allocation8 + $0x30] sm:$0xf]
        %v2466 = vld [vmem:[#allocation8 + $0x34] sm:$0xf]
        %v2467 = vld [vmem:[#allocation8 + $0x38] sm:$0xf]
        %v2468 = vld [vmem:[#allocation8 + $0x3c] sm:$0xf]
        %v2469 = vld [vmem:[#allocation8 + $0x40] sm:$0xf]
        %v2470 = vld [vmem:[#allocation8 + $0x44] sm:$0xf]
        %v2471 = vld [vmem:[#allocation8 + $0x48] sm:$0xf]
        %v2472 = vld [vmem:[#allocation8 + $0x4c] sm:$0xf]
        %v2473 = vld [vmem:[#allocation8 + $0x50] sm:$0xf]
        %v2474 = vld [vmem:[#allocation8 + $0x54] sm:$0xf]
        %v2475 = vld [vmem:[#allocation8 + $0x58] sm:$0xf]
        %v2476 = vld [vmem:[#allocation8 + $0x5c] sm:$0xf]
        %v2477 = vld [vmem:[#allocation8 + $0x60] sm:$0xf]
        %v2478 = vld [vmem:[#allocation8 + $0x64] sm:$0xf]
        %v2479 = vld [vmem:[#allocation8 + $0x68] sm:$0xf]
        %v2480 = vld [vmem:[#allocation8 + $0x6c] sm:$0xf]
        %v2481 = vld [vmem:[#allocation8 + $0x70] sm:$0xf]
        %v2482 = vld [vmem:[#allocation8 + $0x74] sm:$0xf]
        %v2483 = vld [vmem:[#allocation8 + $0x78] sm:$0xf]
        %v2484 = vld [vmem:[#allocation8 + $0x7c] sm:$0xf]
        %v2485 = vld [vmem:[#allocation8 + $0x80] sm:$0xf]
        %v2486 = vld [vmem:[#allocation8 + $0x84] sm:$0xf]
        %v2487 = vld [vmem:[#allocation8 + $0x88] sm:$0xf]
        %v2488 = vld [vmem:[#allocation8 + $0x8c] sm:$0xf]
        %v2489 = vld [vmem:[#allocation8 + $0x90] sm:$0xf]
        %v2490 = vld [vmem:[#allocation8 + $0x94] sm:$0xf]
        %v2491 = vld [vmem:[#allocation8 + $0x98] sm:$0xf]
        %v2492 = vld [vmem:[#allocation8 + $0x9c] sm:$0xf]
        %v2493 = vld [vmem:[#allocation8 + $0xa0] sm:$0xf]
        %v2494 = vld [vmem:[#allocation8 + $0xa4] sm:$0xf]
        %v2495 = vld [vmem:[#allocation8 + $0xa8] sm:$0xf]
        %v2496 = vld [vmem:[#allocation8 + $0xac] sm:$0xf]
        %v2497 = vld [vmem:[#allocation8 + $0xb0] sm:$0xf]
        %v2498 = vld [vmem:[#allocation8 + $0xb4] sm:$0xf]
        %v2499 = vld [vmem:[#allocation8 + $0xb8] sm:$0xf]
        %v2500 = vld [vmem:[#allocation8 + $0xbc] sm:$0xf]
        %v2501 = vld [vmem:[#allocation8 + $0xc0] sm:$0xf]
        %v2502 = vld [vmem:[#allocation8 + $0xc4] sm:$0xf]
        %v2503 = vld [vmem:[#allocation8 + $0xc8] sm:$0xf]
        %v2504 = vld [vmem:[#allocation8 + $0xcc] sm:$0xf]
        %v2505 = vld [vmem:[#allocation8 + $0xd0] sm:$0xf]
        %v2506 = vld [vmem:[#allocation8 + $0xd4] sm:$0xf]
        %v2507 = vld [vmem:[#allocation8 + $0xd8] sm:$0xf]
        %v2508 = vld [vmem:[#allocation8 + $0xdc] sm:$0xf]
        %v2509 = vld [vmem:[#allocation8 + $0xe0] sm:$0xf]
        %v2510 = vld [vmem:[#allocation8 + $0xe4] sm:$0xf]
        %v2511 = vld [vmem:[#allocation8 + $0xe8] sm:$0xf]
        %v2512 = vld [vmem:[#allocation8 + $0xec] sm:$0xf]
        %v2513 = vld [vmem:[#allocation8 + $0xf0] sm:$0xf]
        %v2514 = vld [vmem:[#allocation8 + $0xf4] sm:$0xf]
        %v2515 = vld [vmem:[#allocation8 + $0xf8] sm:$0xf]
        %v2516 = vld [vmem:[#allocation8 + $0xfc] sm:$0xf]
        %v2517 = vld [vmem:[%s4] sm:$0x1]
        %v2519 = vperm.slane %v2517, 0
        %v2585 = vunpack.c.l.b16 %v2453
        %v2586 = vunpack.c.l.b16 %v2454
        %v2587 = vunpack.c.l.b16 %v2455
        %v2588 = vunpack.c.l.b16 %v2456
        %v2589 = vunpack.c.l.b16 %v2457
        %v2590 = vunpack.c.l.b16 %v2458
        %v2591 = vunpack.c.l.b16 %v2459
        %v2592 = vunpack.c.l.b16 %v2460
        %v2593 = vunpack.c.l.b16 %v2461
        %v2594 = vunpack.c.l.b16 %v2462
        %v2595 = vunpack.c.l.b16 %v2463
        %v2596 = vunpack.c.l.b16 %v2464
        %v2597 = vunpack.c.l.b16 %v2465
        %v2598 = vunpack.c.l.b16 %v2466
        %v2599 = vunpack.c.l.b16 %v2467
        %v2600 = vunpack.c.l.b16 %v2468
        %v2601 = vunpack.c.l.b16 %v2469
        %v2602 = vunpack.c.l.b16 %v2470
        %v2603 = vunpack.c.l.b16 %v2471
        %v2604 = vunpack.c.l.b16 %v2472
        %v2605 = vunpack.c.l.b16 %v2473
        %v2606 = vunpack.c.l.b16 %v2474
        %v2607 = vunpack.c.l.b16 %v2475
        %v2608 = vunpack.c.l.b16 %v2476
        %v2609 = vunpack.c.l.b16 %v2477
        %v2610 = vunpack.c.l.b16 %v2478
        %v2611 = vunpack.c.l.b16 %v2479
        %v2612 = vunpack.c.l.b16 %v2480
        %v2613 = vunpack.c.l.b16 %v2481
        %v2614 = vunpack.c.l.b16 %v2482
        %v2615 = vunpack.c.l.b16 %v2483
        %v2616 = vunpack.c.l.b16 %v2484
        %v2617 = vunpack.c.l.b16 %v2485
        %v2618 = vunpack.c.l.b16 %v2486
        %v2619 = vunpack.c.l.b16 %v2487
        %v2620 = vunpack.c.l.b16 %v2488
        %v2621 = vunpack.c.l.b16 %v2489
        %v2622 = vunpack.c.l.b16 %v2490
        %v2623 = vunpack.c.l.b16 %v2491
        %v2624 = vunpack.c.l.b16 %v2492
        %v2625 = vunpack.c.l.b16 %v2493
        %v2626 = vunpack.c.l.b16 %v2494
        %v2627 = vunpack.c.l.b16 %v2495
        %v2628 = vunpack.c.l.b16 %v2496
        %v2629 = vunpack.c.l.b16 %v2497
        %v2630 = vunpack.c.l.b16 %v2498
        %v2631 = vunpack.c.l.b16 %v2499
        %v2632 = vunpack.c.l.b16 %v2500
        %v2633 = vunpack.c.l.b16 %v2501
        %v2634 = vunpack.c.l.b16 %v2502
        %v2635 = vunpack.c.l.b16 %v2503
        %v2636 = vunpack.c.l.b16 %v2504
        %v2637 = vunpack.c.l.b16 %v2505
        %v2638 = vunpack.c.l.b16 %v2506
        %v2639 = vunpack.c.l.b16 %v2507
        %v2640 = vunpack.c.l.b16 %v2508
        %v2641 = vunpack.c.l.b16 %v2509
        %v2642 = vunpack.c.l.b16 %v2510
        %v2643 = vunpack.c.l.b16 %v2511
        %v2644 = vunpack.c.l.b16 %v2512
        %v2645 = vunpack.c.l.b16 %v2513
        %v2646 = vunpack.c.l.b16 %v2514
        %v2647 = vunpack.c.l.b16 %v2515
        %v2648 = vunpack.c.l.b16 %v2516
        %v2649 = vpack.c.b16 %v2586, %v2585
        %v2650 = vpack.c.b16 %v2588, %v2587
        %v2651 = vpack.c.b16 %v2590, %v2589
        %v2652 = vpack.c.b16 %v2592, %v2591
        %v2653 = vpack.c.b16 %v2594, %v2593
        %v2654 = vpack.c.b16 %v2596, %v2595
        %v2655 = vpack.c.b16 %v2598, %v2597
        %v2656 = vpack.c.b16 %v2600, %v2599
        %v2657 = vpack.c.b16 %v2602, %v2601
        %v2658 = vpack.c.b16 %v2604, %v2603
        %v2659 = vpack.c.b16 %v2606, %v2605
        %v2660 = vpack.c.b16 %v2608, %v2607
        %v2661 = vpack.c.b16 %v2610, %v2609
        %v2662 = vpack.c.b16 %v2612, %v2611
        %v2663 = vpack.c.b16 %v2614, %v2613
        %v2664 = vpack.c.b16 %v2616, %v2615
        %v2665 = vpack.c.b16 %v2618, %v2617
        %v2666 = vpack.c.b16 %v2620, %v2619
        %v2667 = vpack.c.b16 %v2622, %v2621
        %v2668 = vpack.c.b16 %v2624, %v2623
        %v2669 = vpack.c.b16 %v2626, %v2625
        %v2670 = vpack.c.b16 %v2628, %v2627
        %v2671 = vpack.c.b16 %v2630, %v2629
        %v2672 = vpack.c.b16 %v2632, %v2631
        %v2673 = vpack.c.b16 %v2634, %v2633
        %v2674 = vpack.c.b16 %v2636, %v2635
        %v2675 = vpack.c.b16 %v2638, %v2637
        %v2676 = vpack.c.b16 %v2640, %v2639
        %v2677 = vpack.c.b16 %v2642, %v2641
        %v2678 = vpack.c.b16 %v2644, %v2643
        %v2679 = vpack.c.b16 %v2646, %v2645
        %v2680 = vpack.c.b16 %v2648, %v2647
        %2713 = vmatpush.bf16.msra.mxu0 %v2656
        %2714 = vmatpush.bf16.msra.mxu0 %v2655
        %2715 = vmatpush.bf16.msra.mxu0 %v2654
        %2716 = vmatpush.bf16.msra.mxu0 %v2653
        %2717 = vmatpush.bf16.msra.mxu0 %v2652
        %2718 = vmatpush.bf16.msra.mxu0 %v2651
        %2719 = vmatpush.bf16.msra.mxu0 %v2650
        %2720 = vmatpush.bf16.msra.mxu0 %v2649
        %2721 = vmatmul.bf16.gmra.mxu0 %v2433
        %v2722 = vpop.f32.mrf.mxu0
        %v2723 = vadd.f32 %v2519, %v2722
        %v2724 = vpop.f32.mrf.mxu0
        %v2725 = vadd.f32 %v2519, %v2724
        %2726 = vmatmul.bf16.gmra.mxu0 %v2437
        %v2727 = vpop.f32.mrf.mxu0
        %v2728 = vadd.f32 %v2519, %v2727
        %v2729 = vpop.f32.mrf.mxu0
        %v2730 = vadd.f32 %v2519, %v2729
        %2731 = vmatmul.bf16.gmra.mxu0 %v2441
        %v2732 = vpop.f32.mrf.mxu0
        %v2733 = vadd.f32 %v2519, %v2732
        %v2734 = vpop.f32.mrf.mxu0
        %v2735 = vadd.f32 %v2519, %v2734
        %2736 = vmatmul.bf16.gmra.mxu0 %v2445
        %v2737 = vpop.f32.mrf.mxu0
        %v2738 = vadd.f32 %v2519, %v2737
        %v2739 = vpop.f32.mrf.mxu0
        %v2740 = vadd.f32 %v2519, %v2739
        %2741 = vmatmul.bf16.gmra.mxu0 %v2449
        %v2742 = vpop.f32.mrf.mxu0
        %v2743 = vadd.f32 %v2519, %v2742
        %v2744 = vpop.f32.mrf.mxu0
        %v2745 = vadd.f32 %v2519, %v2744
        %2746 = vdwg.mxu0
        %2747 = vmatpush.bf16.msra.mxu0 %v2664
        %2748 = vmatpush.bf16.msra.mxu0 %v2663
        %2749 = vmatpush.bf16.msra.mxu0 %v2662
        %2750 = vmatpush.bf16.msra.mxu0 %v2661
        %2751 = vmatpush.bf16.msra.mxu0 %v2660
        %2752 = vmatpush.bf16.msra.mxu0 %v2659
        %2753 = vmatpush.bf16.msra.mxu0 %v2658
        %2754 = vmatpush.bf16.msra.mxu0 %v2657
        %2755 = vmatmul.bf16.gmra.mxu0 %v2434
        %v2756 = vpop.f32.mrf.mxu0
        %v2757 = vadd.f32 %v2723, %v2756
        %v2758 = vpop.f32.mrf.mxu0
        %v2759 = vadd.f32 %v2725, %v2758
        %2760 = vmatmul.bf16.gmra.mxu0 %v2438
        %v2761 = vpop.f32.mrf.mxu0
        %v2762 = vadd.f32 %v2728, %v2761
        %v2763 = vpop.f32.mrf.mxu0
        %v2764 = vadd.f32 %v2730, %v2763
        %2765 = vmatmul.bf16.gmra.mxu0 %v2442
        %v2766 = vpop.f32.mrf.mxu0
        %v2767 = vadd.f32 %v2733, %v2766
        %v2768 = vpop.f32.mrf.mxu0
        %v2769 = vadd.f32 %v2735, %v2768
        %2770 = vmatmul.bf16.gmra.mxu0 %v2446
        %v2771 = vpop.f32.mrf.mxu0
        %v2772 = vadd.f32 %v2738, %v2771
        %v2773 = vpop.f32.mrf.mxu0
        %v2774 = vadd.f32 %v2740, %v2773
        %2775 = vmatmul.bf16.gmra.mxu0 %v2450
        %v2776 = vpop.f32.mrf.mxu0
        %v2777 = vadd.f32 %v2743, %v2776
        %v2778 = vpop.f32.mrf.mxu0
        %v2779 = vadd.f32 %v2745, %v2778
        %2780 = vdwg.mxu0
        %2781 = vmatpush.bf16.msra.mxu0 %v2672
        %2782 = vmatpush.bf16.msra.mxu0 %v2671
        %2783 = vmatpush.bf16.msra.mxu0 %v2670
        %2784 = vmatpush.bf16.msra.mxu0 %v2669
        %2785 = vmatpush.bf16.msra.mxu0 %v2668
        %2786 = vmatpush.bf16.msra.mxu0 %v2667
        %2787 = vmatpush.bf16.msra.mxu0 %v2666
        %2788 = vmatpush.bf16.msra.mxu0 %v2665
        %2789 = vmatmul.bf16.gmra.mxu0 %v2435
        %v2790 = vpop.f32.mrf.mxu0
        %v2791 = vadd.f32 %v2757, %v2790
        %v2792 = vpop.f32.mrf.mxu0
        %v2793 = vadd.f32 %v2759, %v2792
        %2794 = vmatmul.bf16.gmra.mxu0 %v2439
        %v2795 = vpop.f32.mrf.mxu0
        %v2796 = vadd.f32 %v2762, %v2795
        %v2797 = vpop.f32.mrf.mxu0
        %v2798 = vadd.f32 %v2764, %v2797
        %2799 = vmatmul.bf16.gmra.mxu0 %v2443
        %v2800 = vpop.f32.mrf.mxu0
        %v2801 = vadd.f32 %v2767, %v2800
        %v2802 = vpop.f32.mrf.mxu0
        %v2803 = vadd.f32 %v2769, %v2802
        %2804 = vmatmul.bf16.gmra.mxu0 %v2447
        %v2805 = vpop.f32.mrf.mxu0
        %v2806 = vadd.f32 %v2772, %v2805
        %v2807 = vpop.f32.mrf.mxu0
        %v2808 = vadd.f32 %v2774, %v2807
        %2809 = vmatmul.bf16.gmra.mxu0 %v2451
        %v2810 = vpop.f32.mrf.mxu0
        %v2811 = vadd.f32 %v2777, %v2810
        %v2812 = vpop.f32.mrf.mxu0
        %v2813 = vadd.f32 %v2779, %v2812
        %2814 = vdwg.mxu0
        %2815 = vmatpush.bf16.msra.mxu0 %v2680
        %2816 = vmatpush.bf16.msra.mxu0 %v2679
        %2817 = vmatpush.bf16.msra.mxu0 %v2678
        %2818 = vmatpush.bf16.msra.mxu0 %v2677
        %2819 = vmatpush.bf16.msra.mxu0 %v2676
        %2820 = vmatpush.bf16.msra.mxu0 %v2675
        %2821 = vmatpush.bf16.msra.mxu0 %v2674
        %2822 = vmatpush.bf16.msra.mxu0 %v2673
        %2823 = vmatmul.bf16.gmra.mxu0 %v2436
        %v2824 = vpop.f32.mrf.mxu0
        %v2825 = vadd.f32 %v2791, %v2824
        %v2826 = vpop.f32.mrf.mxu0
        %v2827 = vadd.f32 %v2793, %v2826
        %2828 = vmatmul.bf16.gmra.mxu0 %v2440
        %v2829 = vpop.f32.mrf.mxu0
        %v2830 = vadd.f32 %v2796, %v2829
        %v2831 = vpop.f32.mrf.mxu0
        %v2832 = vadd.f32 %v2798, %v2831
        %2833 = vmatmul.bf16.gmra.mxu0 %v2444
        %v2834 = vpop.f32.mrf.mxu0
        %v2835 = vadd.f32 %v2801, %v2834
        %v2836 = vpop.f32.mrf.mxu0
        %v2837 = vadd.f32 %v2803, %v2836
        %2838 = vmatmul.bf16.gmra.mxu0 %v2448
        %v2839 = vpop.f32.mrf.mxu0
        %v2840 = vadd.f32 %v2806, %v2839
        %v2841 = vpop.f32.mrf.mxu0
        %v2842 = vadd.f32 %v2808, %v2841
        %2843 = vmatmul.bf16.gmra.mxu0 %v2452
        %v2844 = vpop.f32.mrf.mxu0
        %v2845 = vadd.f32 %v2811, %v2844
        %v2846 = vpop.f32.mrf.mxu0
        %v2847 = vadd.f32 %v2813, %v2846
        %2848 = vdwg.mxu0
        %2849 = vst [vmem:[%s292] sm:$0xff] %v2825
        %2850 = vst [vmem:[%s292 + $0x8] sm:$0xff] %v2827
        %2851 = vst [vmem:[%s292 + $0x10] sm:$0xff] %v2830
        %2852 = vst [vmem:[%s292 + $0x18] sm:$0xff] %v2832
        %2853 = vst [vmem:[%s292 + $0x20] sm:$0xff] %v2835
        %2854 = vst [vmem:[%s292 + $0x28] sm:$0xff] %v2837
        %2855 = vst [vmem:[%s292 + $0x30] sm:$0xff] %v2840
        %2856 = vst [vmem:[%s292 + $0x38] sm:$0xff] %v2842
        %2857 = vst [vmem:[%s292 + $0x40] sm:$0xff] %v2845
        %2858 = vst [vmem:[%s292 + $0x48] sm:$0xff] %v2847
        %s2859 = sand.u32 %s142, 1
        %s2860 = scalar_lea.sflag [#allocation4], %s2859
        %s2861 = sand.u32 %s142, 1
        %s2862 = smul.addr %s2861, 80
        %s2863 = scalar_lea.vmem [#allocation10], %s2862
        // Predicated region
        $region57: #{tpu_custom_call.1} parent=39 // pred_check
          %p2864 = pneg %p152
        $region58: #{tpu_custom_call.1} parent=39 // pred_check_branch
          %2866 = sbr.rel (%p2864) target = $region60
        $region59: #{tpu_custom_call.1} parent=39 // pred_region
          %s2867 = smul.u32 10, %s24
          %2869 = vsyncadd %s2860, 0
          %s2870 = smul.addr %s2867, 8
          %s2871 = scalar_lea.hbm %s5, %s2870
          %s2872 = sshll.u32 %s2863, 4
          %s2873 = int_to_ptr.vmem [resolvable:$true] %s2872
          %s2874 = sshll.u32 %s2871, 4
          %s2875 = int_to_ptr.hbm [resolvable:$true] %s2874
          %2880 = dma.vmem_to_hbm [thread:$0]  %s2873, 1280, %s2875, %s2860, 128, 128, 8
        $region60: #{tpu_custom_call.1} parent=39 // pred_fallthru
          _
      $region40: #{tpu_custom_call.1} parent=5 // pred_fallthru
        _
      %p2881 = scmp.le.s32.totalorder 2, %s19
      // Predicated region
      $region61: #{tpu_custom_call.1} parent=5 // pred_check
        %p2882 = pneg %p2881
      $region62: #{tpu_custom_call.1} parent=5 // pred_check_branch
        %2884 = sbr.rel (%p2882) target = $region64
      $region63: #{tpu_custom_call.1} parent=5 // pred_region
        %s2885 = ssub.s32 %s19, 2
        // Predicated region
        $region65: #{tpu_custom_call.1} parent=63 // pred_check
          %p2886 = pneg %p158
        $region66: #{tpu_custom_call.1} parent=63 // pred_check_branch
          %2888 = sbr.rel (%p2886) target = $region68
        $region67: #{tpu_custom_call.1} parent=63 // pred_region
          %s2889 = sand.u32 %s143, 1
          %s2890 = scalar_lea.sflag [#allocation4], %s2889
          %s2891 = sand.u32 %s143, 1
          %s2892 = smul.addr %s2891, 80
          %s2893 = scalar_lea.vmem [#allocation10], %s2892
          %2895 = dma.done %s2890, 1280
        $region68: #{tpu_custom_call.1} parent=63 // pred_fallthru
          _
      $region64: #{tpu_custom_call.1} parent=5 // pred_fallthru
        _
    $region6: #{tpu_custom_call.1} parent=1 // loop_footer
      %s23 = sadd.s32 1, %s19
    $region7: #{tpu_custom_call.1} parent=1 // loop_footer_branch
      %18 = sbr.rel target = $region3
    $region8: #{tpu_custom_call.1} parent=1 // loop_exit
      _
    %2896 = vsyncpa [#allocation3], 1
    %s2897 = scalar_lea.sflag [#allocation3], 1
    %2898 = vsyncpa %s2897, 1
    %2899 = vsyncpa [#allocation6], 1
    %2900 = vsyncpa [#allocation9], 1
    %2901 = vsyncpa [#allocation4], 1
    %s2902 = scalar_lea.sflag [#allocation4], 1
    %2903 = vsyncpa %s2902, 1

</llo_original>
